<compile_context>
chip_gen: v5e
topology: v5e:2x2
jax: 0.10.0
libtpu: 0.0.40
codegen_flags: <defaults>
</compile_context>

<pallas_src>
from collections import namedtuple
from functools import partial

import jax
import jax.numpy as jnp
from jax import lax
from jax.experimental import pallas as pl
from jax.experimental.pallas import tpu as pltpu

# ---- GLoRIA config constants (GloriaLoss has no learned parameters) ----------
TEMP_ATTENTION = 4.0      # config.model.gloria.temp_attention
TEMP_SIMILARITY = 5.0     # config.model.gloria.temp_similarity
TEMP_LOSS = 10.0          # config.model.gloria.temp_loss
LOCAL_LOSS_WEIGHT = 1.0   # config.model.gloria.local_loss_weight
GLOBAL_LOSS_WEIGHT = 1.0  # config.model.gloria.global_loss_weight
GLOBAL_EPS = 1e-8         # GlobalLoss eps
COS_EPS = 1e-8            # torch.nn.functional.cosine_similarity default eps

_NEG = -1e30              # finite "minus infinity" for masked softmax entries


def _round_up(x, m):
    return (x + m - 1) // m * m


def _softmax_lastdim(x):
    """Stable softmax over the lane (last) axis; denominator via EUP reciprocal."""
    m = jnp.max(x, axis=-1, keepdims=True)
    e = jnp.exp(x - m)
    return e * pl.reciprocal(jnp.sum(e, axis=-1, keepdims=True), approx=True)


def _ce_bidirectional(x):
    """Bidirectional cross-entropy with labels = arange(n) on an (n, n) logits matrix.

    Returns (row_loss, col_loss):
      row_loss = mean_k CE(x[k, :], k)   (softmax over the last / lane axis)
      col_loss = mean_k CE(x[:, k], k)   (softmax over the first / sublane axis)
    """
    n = x.shape[0]
    rows = lax.broadcasted_iota(jnp.int32, (n, n), 0)
    cols = lax.broadcasted_iota(jnp.int32, (n, n), 1)
    trace = jnp.sum(jnp.where(rows == cols, x, 0.0))
    m_r = jnp.max(x, axis=1, keepdims=True)
    lse_r = jnp.sum(m_r + jnp.log(jnp.sum(jnp.exp(x - m_r), axis=1, keepdims=True)))
    m_c = jnp.max(x, axis=0, keepdims=True)
    lse_c = jnp.sum(m_c + jnp.log(jnp.sum(jnp.exp(x - m_c), axis=0, keepdims=True)))
    inv_n = 1.0 / n
    return (lse_r - trace) * inv_n, (lse_c - trace) * inv_n


# ------------------------------ local-loss kernel --------------------------------
def _gloria_local_kernel(lens_ref, img_ref, wrd_ref, attn_ref, sim_ref, *, n_regions):
    """Per-caption local attention / similarity (grid over captions, parallel).

      lens_ref: (B,) int32 SMEM      -- scalar-prefetched caption lengths
      img_ref:  (B, Cpad, D) bf16    -- image regions, channels-last, zero-padded to Cpad
      wrd_ref:  (1, L, D)   bf16     -- words of caption i, channels-last
      attn_ref: (1, L, Cpad) f32 out -- attention map of caption i on image i
      sim_ref:  (1, B, 1)   f32 out  -- similarity_matrix^T row i (caption i vs all images)
    """
    batch, cpad, dim = img_ref.shape
    max_words = wrd_ref.shape[1]

    i = pl.program_id(0)               # caption index
    len_i = lens_ref[i]

    words16 = wrd_ref[0]                                      # (L, D) bf16 (MXU operand)
    words32 = words16.astype(jnp.float32)                     # (L, D) f32  (VPU math)

    word_valid_lane = lax.broadcasted_iota(jnp.int32, (1, max_words), 1) < len_i   # (1, L)
    word_valid_rows = lax.broadcasted_iota(jnp.int32, (max_words, 1), 0) < len_i   # (L, 1)
    region_valid = lax.broadcasted_iota(jnp.int32, (1, 1, cpad), 2) < n_regions    # (1,1,Cpad) static

    img3 = img_ref[...]                                       # (B, Cpad, D) bf16
    img2 = img3.reshape(batch * cpad, dim)                    # free: Cpad % 128 == 0

    # 1) attention scores for ALL images in one MXU matmul: (B*Cpad, D) x (L, D)^T.
    scores = lax.dot_general(img2, words16, (((1,), (1,)), ((), ())),
                             preferred_element_type=jnp.float32)            # (B*Cpad, L)
    scores = jnp.where(word_valid_lane, scores, _NEG)         # mask padded words
    attn_q = _softmax_lastdim(scores)                         # softmax over words (lane)
    attn_q3 = attn_q.reshape(batch, cpad, max_words)          # free: Cpad % 8 == 0

    # 2) batched region softmax: one batched transpose, padded regions masked out.
    attn_qt = jnp.transpose(attn_q3, (0, 2, 1))               # (B, L, Cpad)
    logits = jnp.where(region_valid, attn_qt * TEMP_ATTENTION, _NEG)
    attn_c = _softmax_lastdim(logits)                         # (B, L, Cpad)

    # Attention map of caption i on its OWN image: one-hot reduce over the image axis
    # (single store path; padded regions are exactly 0 after the masked softmax).
    own = lax.broadcasted_iota(jnp.int32, (batch, 1, 1), 0) == i
    attn_i = jnp.sum(jnp.where(own, attn_c, 0.0), axis=0)     # (L, Cpad)
    attn_ref[0] = jnp.where(word_valid_rows, attn_i, 0.0)     # zero padded-word rows

    # 3) batched weighted context: 'blc,bcd->bld' on the MXU (f32 accumulation).
    weighted = lax.dot_general(attn_c.astype(jnp.bfloat16), img3,
                               (((2,), (1,)), ((0,), (0,))),
                               preferred_element_type=jnp.float32)          # (B, L, D)

    # 4) word/context cosine similarity + exp/sum/log aggregation -> sim row.
    wn2 = jnp.sum(words32 * words32, axis=1, keepdims=True)                 # (L, 1)
    inv_wn = lax.rsqrt(jnp.maximum(wn2, COS_EPS * COS_EPS))                 # 1/max(|w|,eps)
    dots = jnp.sum(words32[None] * weighted, axis=2, keepdims=True)         # (B, L, 1)
    cn2 = jnp.sum(weighted * weighted, axis=2, keepdims=True)               # (B, L, 1)
    cos = dots * inv_wn[None] * lax.rsqrt(jnp.maximum(cn2, COS_EPS * COS_EPS))
    wsim = jnp.where(word_valid_rows[None], jnp.exp(cos * TEMP_SIMILARITY), 0.0)
    sim_ref[0] = jnp.log(jnp.sum(wsim, axis=1))                             # (B, 1)


# ------------------------------ finalize kernel ----------------------------------
def _gloria_finalize_kernel(sim_ref, ig_ref, tg_ref, loss_ref):
    """Tiny finalize: local bidirectional CE + global cosine CE -> (1, 8) losses.

      sim_ref: (B, B) f32 -- similarity_matrix^T (rows = captions, cols = images)
      ig_ref:  (B, Dg) f32 -- global image embeddings
      tg_ref:  (B, Dg) f32 -- global text embeddings
      loss_ref:(1, 8)  f32 -- [l_i2t, l_t2i, g_i2t, g_t2i, local, global, total, 0]
    """
    x_loc = sim_ref[...] * TEMP_LOSS
    l_t2i, l_i2t = _ce_bidirectional(x_loc)   # rows of sim^T -> text_to_image

    ig = ig_ref[...]
    tg = tg_ref[...]
    inv_ni = lax.rsqrt(jnp.maximum(jnp.sum(ig * ig, axis=1, keepdims=True),
                                   GLOBAL_EPS * GLOBAL_EPS))
    inv_nt = lax.rsqrt(jnp.maximum(jnp.sum(tg * tg, axis=1, keepdims=True),
                                   GLOBAL_EPS * GLOBAL_EPS))
    x_glb = lax.dot_general(ig * inv_ni, tg * inv_nt, (((1,), (1,)), ((), ())),
                            preferred_element_type=jnp.float32) * TEMP_LOSS
    g_i2t, g_t2i = _ce_bidirectional(x_glb)

    local_loss = (l_i2t + l_t2i) * LOCAL_LOSS_WEIGHT
    global_loss = (g_i2t + g_t2i) * GLOBAL_LOSS_WEIGHT
    total_loss = local_loss + global_loss
    vals = [l_i2t, l_t2i, g_i2t, g_t2i, local_loss, global_loss, total_loss]
    loss_ref[...] = jnp.concatenate(
        [v.reshape(1, 1) for v in vals] + [jnp.zeros((1, 1), jnp.float32)], axis=1)


# ------------------------------ wrapper -------------------------------------------
def _gloria_loss_impl(img_emb_local, img_emb_global, text_emb_local,
                      text_emb_global, caption_lengths):
    B, D, H, W = img_emb_local.shape
    C = H * W
    L = text_emb_local.shape[2]
    Dg = img_emb_global.shape[1]
    Cpad = _round_up(C, 128)   # lane-dense attention output + tile-aligned reshapes

    # Channels-last layouts so every matmul contracts over the lane (D) axis, and
    # bf16 MXU operands (f32 accumulation inside the kernel).
    img_cd = jnp.transpose(img_emb_local.reshape(B, D, C), (0, 2, 1)).astype(jnp.bfloat16)
    if Cpad != C:
        img_cd = jnp.pad(img_cd, ((0, 0), (0, Cpad - C), (0, 0)))           # (B, Cpad, D)
    wrd_ld = jnp.transpose(text_emb_local, (0, 2, 1)).astype(jnp.bfloat16)  # (B, L, D)

    attn, sim3 = pl.pallas_call(
        partial(_gloria_local_kernel, n_regions=C),
        out_shape=(jax.ShapeDtypeStruct((B, L, Cpad), jnp.float32),
                   jax.ShapeDtypeStruct((B, B, 1), jnp.float32)),
        grid_spec=pltpu.PrefetchScalarGridSpec(
            num_scalar_prefetch=1,
            grid=(B,),
            in_specs=[
                # TODO(synk): production sizes: tile this constant block over B
                # and/or single-buffer it (pipeline_mode=pl.Buffered(1)) to fit
                # v7x's 64 MiB VMEM.
                pl.BlockSpec((B, Cpad, D), lambda i, lens: (0, 0, 0)),
                # TODO(synk): tile TQ captions per step so the first matmul's N
                # dimension (TQ*L) fills the MXU lanes.
                pl.BlockSpec((1, L, D), lambda i, lens: (i, 0, 0)),
            ],
            out_specs=(
                pl.BlockSpec((1, L, Cpad), lambda i, lens: (i, 0, 0)),
                pl.BlockSpec((1, B, 1), lambda i, lens: (i, 0, 0)),
            ),
        ),
        compiler_params=pltpu.CompilerParams(
            # No cross-step state any more: each caption writes only its own
            # blocks, so this axis can use both v7x TensorCores.
            dimension_semantics=("parallel",),
            vmem_limit_bytes=64 * 1024 * 1024,
        ),
    )(caption_lengths.astype(jnp.int32), img_cd, wrd_ld)

    sim_t = sim3[:, :, 0]   # (B, B): sim_t[i, b] = similarity_matrix[b, i]

    losses = pl.pallas_call(
        _gloria_finalize_kernel,
        out_shape=jax.ShapeDtypeStruct((1, 8), jnp.float32),
        grid=(1,),
        in_specs=[pl.BlockSpec((B, B), lambda i: (0, 0)),
                  pl.BlockSpec((B, Dg), lambda i: (0, 0)),
                  pl.BlockSpec((B, Dg), lambda i: (0, 0))],
        out_specs=pl.BlockSpec((1, 8), lambda i: (0, 0)),
        compiler_params=pltpu.CompilerParams(dimension_semantics=("arbitrary",)),
    )(sim_t, img_emb_global.astype(jnp.float32), text_emb_global.astype(jnp.float32))

    return attn[:, :, :C], losses[0]


_gloria_loss = jax.jit(_gloria_loss_impl)


LossResult = namedtuple('LossResult', [
    'total_loss', 'attn_maps', 'global_loss', 'local_loss',
    'local_loss_image_to_text', 'local_loss_text_to_image',
    'global_loss_image_to_text', 'global_loss_text_to_image'])


def gloria_forward(img_emb_local, img_emb_global, text_emb_local, text_emb_global,
                   sents):
    # Caption lengths computed from tokenized sentences exactly like the PyTorch
    # module (host-side Python glue, not a kernel concern).
    caption_lengths = [len([w for w in sent if not w.startswith('[')]) + 1
                       for sent in sents]
    lengths_arr = jnp.asarray(caption_lengths, dtype=jnp.int32)

    attn_flat, losses = _gloria_loss(img_emb_local, img_emb_global,
                                     text_emb_local, text_emb_global, lengths_arr)

    B, D, H, W = img_emb_local.shape
    Lmax = text_emb_local.shape[2]
    attn_4d = attn_flat.reshape(B, Lmax, H, W)
    # attn_maps[i]: (1, L_i, H, W) -- attention of caption i on image i.
    attn_maps = [attn_4d[i:i + 1, :caption_lengths[i]] for i in range(B)]

    l_i2t, l_t2i, g_i2t, g_t2i = losses[0], losses[1], losses[2], losses[3]
    local_loss, global_loss, total_loss = losses[4], losses[5], losses[6]

    return LossResult(total_loss=total_loss, attn_maps=attn_maps,
                      global_loss=global_loss, local_loss=local_loss,
                      local_loss_image_to_text=l_i2t,
                      local_loss_text_to_image=l_t2i,
                      global_loss_image_to_text=g_i2t,
                      global_loss_text_to_image=g_t2i)


# ------------------------------ main ---------------------------------------------
if __name__ == "__main__":
    B, D, H, W, Lmax = 2, 128, 4, 4, 8

    key = jax.random.PRNGKey(0)
    k1, k2, k3, k4 = jax.random.split(key, 4)
    img_emb_local = jax.random.normal(k1, (B, D, H, W), dtype=jnp.float32)
    img_emb_global = jax.random.normal(k2, (B, D), dtype=jnp.float32)
    text_emb_local = jax.random.normal(k3, (B, D, Lmax), dtype=jnp.float32)
    text_emb_global = jax.random.normal(k4, (B, D), dtype=jnp.float32)

    # Tokenized sentences (caption lengths 4 and 5, both <= Lmax).
    sents = [["[CLS]", "a", "chest", "xray", "[SEP]"],
             ["[CLS]", "no", "acute", "findings", "seen", "[SEP]"]]

    result = gloria_forward(img_emb_local, img_emb_global,
                            text_emb_local, text_emb_global, sents)

    jax.block_until_ready(result.total_loss)
    for m in result.attn_maps:
        jax.block_until_ready(m)

    print("KERNEL_OK")
</pallas_src>

<mosaic_0001>
module attributes {stable_mosaic.version = 11 : i64} {
  func.func @_gloria_local_kernel(%arg0: i32, %arg1: memref<2xi32, #tpu.memory_space<smem>>, %arg2: memref<2x128x128xbf16, #tpu.memory_space<vmem>>, %arg3: memref<1x8x128xbf16, #tpu.memory_space<vmem>>, %arg4: memref<1x8x128xf32, #tpu.memory_space<vmem>>, %arg5: memref<1x2x1xf32, #tpu.memory_space<vmem>>) attributes {dimension_semantics = [#tpu.dimension_semantics<parallel>], iteration_bounds = array<i64: 2>, scalar_prefetch = 1 : i64, scratch_operands = 0 : i64, tpu.core_type = #tpu.core_type<tc>, window_params = [{pipeline_mode = #tpu.pipeline_mode<synchronous>, transform_indices = @transform_0, window_bounds = array<i64: 2, 128, 128>}, {transform_indices = @transform_1, window_bounds = array<i64: 1, 8, 128>}, {transform_indices = @transform_2, window_bounds = array<i64: 1, 8, 128>}, {transform_indices = @transform_3, window_bounds = array<i64: 1, 2, 1>}]} {
    %0 = arith.index_cast %arg0 : i32 to index
    %1 = memref.load %arg1[%0] : memref<2xi32, #tpu.memory_space<smem>>
    %c0 = arith.constant 0 : index
    %c0_0 = arith.constant 0 : index
    %c0_1 = arith.constant 0 : index
    %2 = vector.load %arg3[%c0, %c0_0, %c0_1] : memref<1x8x128xbf16, #tpu.memory_space<vmem>>, vector<1x8x128xbf16>
    %3 = vector.shape_cast %2 : vector<1x8x128xbf16> to vector<8x128xbf16>
    %4 = arith.extf %3 : vector<8x128xbf16> to vector<8x128xf32>
    %5 = tpu.iota {dimensions = array<i32: 1>} : vector<1x8xi32>
    %6 = vector.broadcast %1 : i32 to vector<1x8xi32>
    %7 = arith.cmpi slt, %5, %6 : vector<1x8xi32>
    %8 = tpu.iota {dimensions = array<i32: 0>} : vector<8x1xi32>
    %9 = vector.broadcast %1 : i32 to vector<8x1xi32>
    %10 = arith.cmpi slt, %8, %9 : vector<8x1xi32>
    %11 = tpu.iota {dimensions = array<i32: 2>} : vector<1x1x128xi32>
    %c16_i32 = arith.constant 16 : i32
    %12 = vector.broadcast %c16_i32 : i32 to vector<1x1x128xi32>
    %13 = arith.cmpi slt, %11, %12 : vector<1x1x128xi32>
    %c0_2 = arith.constant 0 : index
    %c0_3 = arith.constant 0 : index
    %c0_4 = arith.constant 0 : index
    %14 = vector.load %arg2[%c0_2, %c0_3, %c0_4] : memref<2x128x128xbf16, #tpu.memory_space<vmem>>, vector<2x128x128xbf16>
    %15 = vector.shape_cast %14 : vector<2x128x128xbf16> to vector<256x128xbf16>
    %cst = arith.constant dense<0.000000e+00> : vector<256x8xf32>
    %16 = tpu.matmul %15, %3, %cst {dimension_numbers = #tpu.dot_dimension_numbers<[1], [1], [0], [0], [0, 0, 1, 0], [], []>} : vector<256x128xbf16>, vector<8x128xbf16>, vector<256x8xf32> -> vector<256x8xf32>
    %cst_5 = arith.constant -1.000000e+30 : f32
    %17 = vector.shape_cast %7 : vector<1x8xi1> to vector<1x8xi1>
    %18 = vector.broadcast %17 : vector<1x8xi1> to vector<256x8xi1>
    %19 = vector.broadcast %cst_5 : f32 to vector<256x8xf32>
    %20 = arith.select %18, %16, %19 : vector<256x8xi1>, vector<256x8xf32>
    %cst_6 = arith.constant dense<0xFF800000> : vector<256xf32>
    %21 = vector.multi_reduction <maximumf>, %20, %cst_6 [1] : vector<256x8xf32> to vector<256xf32>
    %22 = vector.shape_cast %21 : vector<256xf32> to vector<256x1xf32>
    %23 = vector.broadcast %22 : vector<256x1xf32> to vector<256x8xf32>
    %24 = arith.subf %20, %23 : vector<256x8xf32>
    %25 = math.exp %24 : vector<256x8xf32>
    %cst_7 = arith.constant dense<0.000000e+00> : vector<256xf32>
    %26 = vector.multi_reduction <add>, %25, %cst_7 [1] : vector<256x8xf32> to vector<256xf32>
    %27 = vector.shape_cast %26 : vector<256xf32> to vector<256x1xf32>
    %28 = tpu.reciprocal %27 {approx = true} : vector<256x1xf32> -> vector<256x1xf32>
    %29 = vector.broadcast %28 : vector<256x1xf32> to vector<256x8xf32>
    %30 = arith.mulf %25, %29 : vector<256x8xf32>
    %31 = vector.shape_cast %30 : vector<256x8xf32> to vector<2x128x8xf32>
    %32 = tpu.transpose %31, [0, 2, 1] : vector<2x128x8xf32> -> vector<2x8x128xf32>
    %cst_8 = arith.constant 4.000000e+00 : f32
    %33 = vector.broadcast %cst_8 : f32 to vector<2x8x128xf32>
    %34 = arith.mulf %32, %33 : vector<2x8x128xf32>
    %cst_9 = arith.constant -1.000000e+30 : f32
    %35 = vector.shape_cast %13 : vector<1x1x128xi1> to vector<1x1x128xi1>
    %36 = vector.broadcast %35 : vector<1x1x128xi1> to vector<2x8x128xi1>
    %37 = vector.broadcast %cst_9 : f32 to vector<2x8x128xf32>
    %38 = arith.select %36, %34, %37 : vector<2x8x128xi1>, vector<2x8x128xf32>
    %cst_10 = arith.constant dense<0xFF800000> : vector<2x8xf32>
    %39 = vector.multi_reduction <maximumf>, %38, %cst_10 [2] : vector<2x8x128xf32> to vector<2x8xf32>
    %40 = vector.shape_cast %39 : vector<2x8xf32> to vector<2x8x1xf32>
    %41 = vector.broadcast %40 : vector<2x8x1xf32> to vector<2x8x128xf32>
    %42 = arith.subf %38, %41 : vector<2x8x128xf32>
    %43 = math.exp %42 : vector<2x8x128xf32>
    %cst_11 = arith.constant dense<0.000000e+00> : vector<2x8xf32>
    %44 = vector.multi_reduction <add>, %43, %cst_11 [2] : vector<2x8x128xf32> to vector<2x8xf32>
    %45 = vector.shape_cast %44 : vector<2x8xf32> to vector<2x8x1xf32>
    %46 = tpu.reciprocal %45 {approx = true} : vector<2x8x1xf32> -> vector<2x8x1xf32>
    %47 = vector.broadcast %46 : vector<2x8x1xf32> to vector<2x8x128xf32>
    %48 = arith.mulf %43, %47 : vector<2x8x128xf32>
    %49 = tpu.iota {dimensions = array<i32: 0>} : vector<2x1x1xi32>
    %50 = vector.broadcast %arg0 : i32 to vector<2x1x1xi32>
    %51 = arith.cmpi eq, %49, %50 : vector<2x1x1xi32>
    %cst_12 = arith.constant 0.000000e+00 : f32
    %52 = vector.shape_cast %51 : vector<2x1x1xi1> to vector<2x1x1xi1>
    %53 = vector.broadcast %52 : vector<2x1x1xi1> to vector<2x8x128xi1>
    %54 = vector.broadcast %cst_12 : f32 to vector<2x8x128xf32>
    %55 = arith.select %53, %48, %54 : vector<2x8x128xi1>, vector<2x8x128xf32>
    %cst_13 = arith.constant dense<0.000000e+00> : vector<8x128xf32>
    %56 = vector.multi_reduction <add>, %55, %cst_13 [0] : vector<2x8x128xf32> to vector<8x128xf32>
    %cst_14 = arith.constant 0.000000e+00 : f32
    %57 = vector.shape_cast %10 : vector<8x1xi1> to vector<8x1xi1>
    %58 = vector.broadcast %57 : vector<8x1xi1> to vector<8x128xi1>
    %59 = vector.broadcast %cst_14 : f32 to vector<8x128xf32>
    %60 = arith.select %58, %56, %59 : vector<8x128xi1>, vector<8x128xf32>
    %c0_15 = arith.constant 0 : index
    %c0_16 = arith.constant 0 : index
    %c0_17 = arith.constant 0 : index
    %61 = vector.load %arg4[%c0_15, %c0_16, %c0_17] : memref<1x8x128xf32, #tpu.memory_space<vmem>>, vector<1x8x128xf32>
    %62 = vector.shape_cast %61 : vector<1x8x128xf32> to vector<8x128xf32>
    %63 = vector.shape_cast %60 : vector<8x128xf32> to vector<1x8x128xf32>
    tpu.vector_store %arg4[%c0_15, %c0_16, %c0_17], %63 {strides = array<i32>} : memref<1x8x128xf32, #tpu.memory_space<vmem>>, vector<1x8x128xf32>,
    %64 = arith.truncf %48 : vector<2x8x128xf32> to vector<2x8x128xbf16>
    %cst_18 = arith.constant dense<0.000000e+00> : vector<2x8x128xf32>
    %65 = tpu.matmul %64, %14, %cst_18 {dimension_numbers = #tpu.dot_dimension_numbers<[2], [1], [1], [2], [0, 0, 0, 1, 1, 2], [0], [0]>} : vector<2x8x128xbf16>, vector<2x128x128xbf16>, vector<2x8x128xf32> -> vector<2x8x128xf32>
    %66 = arith.mulf %4, %4 : vector<8x128xf32>
    %cst_19 = arith.constant dense<0.000000e+00> : vector<8xf32>
    %67 = vector.multi_reduction <add>, %66, %cst_19 [1] : vector<8x128xf32> to vector<8xf32>
    %68 = vector.shape_cast %67 : vector<8xf32> to vector<8x1xf32>
    %cst_20 = arith.constant 1.000000e-16 : f32
    %69 = vector.broadcast %cst_20 : f32 to vector<8x1xf32>
    %70 = arith.maximumf %68, %69 : vector<8x1xf32>
    %71 = math.rsqrt %70 : vector<8x1xf32>
    %72 = vector.shape_cast %4 : vector<8x128xf32> to vector<1x8x128xf32>
    %73 = vector.broadcast %72 : vector<1x8x128xf32> to vector<2x8x128xf32>
    %74 = arith.mulf %73, %65 : vector<2x8x128xf32>
    %cst_21 = arith.constant dense<0.000000e+00> : vector<2x8xf32>
    %75 = vector.multi_reduction <add>, %74, %cst_21 [2] : vector<2x8x128xf32> to vector<2x8xf32>
    %76 = vector.shape_cast %75 : vector<2x8xf32> to vector<2x8x1xf32>
    %77 = arith.mulf %65, %65 : vector<2x8x128xf32>
    %cst_22 = arith.constant dense<0.000000e+00> : vector<2x8xf32>
    %78 = vector.multi_reduction <add>, %77, %cst_22 [2] : vector<2x8x128xf32> to vector<2x8xf32>
    %79 = vector.shape_cast %78 : vector<2x8xf32> to vector<2x8x1xf32>
    %80 = vector.shape_cast %71 : vector<8x1xf32> to vector<1x8x1xf32>
    %81 = vector.broadcast %80 : vector<1x8x1xf32> to vector<2x8x1xf32>
    %82 = arith.mulf %76, %81 : vector<2x8x1xf32>
    %cst_23 = arith.constant 1.000000e-16 : f32
    %83 = vector.broadcast %cst_23 : f32 to vector<2x8x1xf32>
    %84 = arith.maximumf %79, %83 : vector<2x8x1xf32>
    %85 = math.rsqrt %84 : vector<2x8x1xf32>
    %86 = arith.mulf %82, %85 : vector<2x8x1xf32>
    %87 = vector.shape_cast %10 : vector<8x1xi1> to vector<1x8x1xi1>
    %cst_24 = arith.constant 5.000000e+00 : f32
    %88 = vector.broadcast %cst_24 : f32 to vector<2x8x1xf32>
    %89 = arith.mulf %86, %88 : vector<2x8x1xf32>
    %90 = math.exp %89 : vector<2x8x1xf32>
    %cst_25 = arith.constant 0.000000e+00 : f32
    %91 = vector.shape_cast %87 : vector<1x8x1xi1> to vector<1x8x1xi1>
    %92 = vector.broadcast %91 : vector<1x8x1xi1> to vector<2x8x1xi1>
    %93 = vector.broadcast %cst_25 : f32 to vector<2x8x1xf32>
    %94 = arith.select %92, %90, %93 : vector<2x8x1xi1>, vector<2x8x1xf32>
    %cst_26 = arith.constant dense<0.000000e+00> : vector<2x1xf32>
    %95 = vector.multi_reduction <add>, %94, %cst_26 [1] : vector<2x8x1xf32> to vector<2x1xf32>
    %96 = math.log %95 : vector<2x1xf32>
    %c0_27 = arith.constant 0 : index
    %c0_28 = arith.constant 0 : index
    %c0_29 = arith.constant 0 : index
    %97 = vector.load %arg5[%c0_27, %c0_28, %c0_29] : memref<1x2x1xf32, #tpu.memory_space<vmem>>, vector<1x2x1xf32>
    %98 = vector.shape_cast %97 : vector<1x2x1xf32> to vector<2x1xf32>
    %99 = vector.shape_cast %96 : vector<2x1xf32> to vector<1x2x1xf32>
    tpu.vector_store %arg5[%c0_27, %c0_28, %c0_29], %99 {strides = array<i32>} : memref<1x2x1xf32, #tpu.memory_space<vmem>>, vector<1x2x1xf32>,
    return
  }
  func.func @transform_0(%arg0: i32, %arg1: memref<2xi32, #tpu.memory_space<smem>>) -> (i32, i32, i32) {
    %c0_i32 = arith.constant 0 : i32
    %c0_i32_0 = arith.constant 0 : i32
    %c0_i32_1 = arith.constant 0 : i32
    %c0_i32_2 = arith.constant 0 : i32
    return %c0_i32, %c0_i32_0, %c0_i32_1 : i32, i32, i32
  }
  func.func @transform_1(%arg0: i32, %arg1: memref<2xi32, #tpu.memory_space<smem>>) -> (i32, i32, i32) {
    %c0_i32 = arith.constant 0 : i32
    %c0_i32_0 = arith.constant 0 : i32
    %c0_i32_1 = arith.constant 0 : i32
    return %arg0, %c0_i32, %c0_i32_0 : i32, i32, i32
  }
  func.func @transform_2(%arg0: i32, %arg1: memref<2xi32, #tpu.memory_space<smem>>) -> (i32, i32, i32) {
    %c0_i32 = arith.constant 0 : i32
    %c0_i32_0 = arith.constant 0 : i32
    %c0_i32_1 = arith.constant 0 : i32
    return %arg0, %c0_i32, %c0_i32_0 : i32, i32, i32
  }
  func.func @transform_3(%arg0: i32, %arg1: memref<2xi32, #tpu.memory_space<smem>>) -> (i32, i32, i32) {
    %c0_i32 = arith.constant 0 : i32
    %c0_i32_0 = arith.constant 0 : i32
    %c0_i32_1 = arith.constant 0 : i32
    return %arg0, %c0_i32, %c0_i32_0 : i32, i32, i32
  }
}

module attributes {stable_mosaic.version = 11 : i64} {
  func.func @_gloria_finalize_kernel(%arg0: i32, %arg1: memref<2x2xf32, #tpu.memory_space<vmem>>, %arg2: memref<2x128xf32, #tpu.memory_space<vmem>>, %arg3: memref<2x128xf32, #tpu.memory_space<vmem>>, %arg4: memref<1x8xf32, #tpu.memory_space<vmem>>) attributes {dimension_semantics = [#tpu.dimension_semantics<arbitrary>], iteration_bounds = array<i64: 1>, scalar_prefetch = 0 : i64, scratch_operands = 0 : i64, tpu.core_type = #tpu.core_type<tc>, window_params = [{pipeline_mode = #tpu.pipeline_mode<synchronous>, transform_indices = @transform_0, window_bounds = array<i64: 2, 2>}, {pipeline_mode = #tpu.pipeline_mode<synchronous>, transform_indices = @transform_1, window_bounds = array<i64: 2, 128>}, {pipeline_mode = #tpu.pipeline_mode<synchronous>, transform_indices = @transform_2, window_bounds = array<i64: 2, 128>}, {pipeline_mode = #tpu.pipeline_mode<synchronous>, transform_indices = @transform_3, window_bounds = array<i64: 1, 8>}]} {
    %c0 = arith.constant 0 : index
    %c0_0 = arith.constant 0 : index
    %0 = vector.load %arg1[%c0, %c0_0] : memref<2x2xf32, #tpu.memory_space<vmem>>, vector<2x2xf32>
    %cst = arith.constant 1.000000e+01 : f32
    %1 = vector.broadcast %cst : f32 to vector<2x2xf32>
    %2 = arith.mulf %0, %1 : vector<2x2xf32>
    %3 = tpu.iota {dimensions = array<i32: 0>} : vector<2x2xi32>
    %4 = tpu.iota {dimensions = array<i32: 1>} : vector<2x2xi32>
    %5 = arith.cmpi eq, %3, %4 : vector<2x2xi32>
    %cst_1 = arith.constant 0.000000e+00 : f32
    %6 = vector.broadcast %cst_1 : f32 to vector<2x2xf32>
    %7 = arith.select %5, %2, %6 : vector<2x2xi1>, vector<2x2xf32>
    %8 = vector.shape_cast %7 : vector<2x2xf32> to vector<1x2x2xf32>
    %cst_2 = arith.constant dense<0.000000e+00> : vector<1xf32>
    %9 = vector.multi_reduction <add>, %8, %cst_2 [1, 2] : vector<1x2x2xf32> to vector<1xf32>
    %10 = vector.shape_cast %9 : vector<1xf32> to vector<1x1x1xf32>
    %11 = vector.extract %10[0, 0, 0] : f32 from vector<1x1x1xf32>
    %cst_3 = arith.constant dense<0xFF800000> : vector<2xf32>
    %12 = vector.multi_reduction <maximumf>, %2, %cst_3 [1] : vector<2x2xf32> to vector<2xf32>
    %13 = vector.shape_cast %12 : vector<2xf32> to vector<2x1xf32>
    %14 = vector.broadcast %13 : vector<2x1xf32> to vector<2x2xf32>
    %15 = arith.subf %2, %14 : vector<2x2xf32>
    %16 = math.exp %15 : vector<2x2xf32>
    %cst_4 = arith.constant dense<0.000000e+00> : vector<2xf32>
    %17 = vector.multi_reduction <add>, %16, %cst_4 [1] : vector<2x2xf32> to vector<2xf32>
    %18 = vector.shape_cast %17 : vector<2xf32> to vector<2x1xf32>
    %19 = math.log %18 : vector<2x1xf32>
    %20 = arith.addf %13, %19 : vector<2x1xf32>
    %21 = vector.shape_cast %20 : vector<2x1xf32> to vector<1x2x1xf32>
    %cst_5 = arith.constant dense<0.000000e+00> : vector<1xf32>
    %22 = vector.multi_reduction <add>, %21, %cst_5 [1, 2] : vector<1x2x1xf32> to vector<1xf32>
    %23 = vector.shape_cast %22 : vector<1xf32> to vector<1x1x1xf32>
    %24 = vector.extract %23[0, 0, 0] : f32 from vector<1x1x1xf32>
    %cst_6 = arith.constant dense<0xFF800000> : vector<2xf32>
    %25 = vector.multi_reduction <maximumf>, %2, %cst_6 [0] : vector<2x2xf32> to vector<2xf32>
    %26 = vector.shape_cast %25 : vector<2xf32> to vector<1x2xf32>
    %27 = vector.broadcast %26 : vector<1x2xf32> to vector<2x2xf32>
    %28 = arith.subf %2, %27 : vector<2x2xf32>
    %29 = math.exp %28 : vector<2x2xf32>
    %cst_7 = arith.constant dense<0.000000e+00> : vector<2xf32>
    %30 = vector.multi_reduction <add>, %29, %cst_7 [0] : vector<2x2xf32> to vector<2xf32>
    %31 = vector.shape_cast %30 : vector<2xf32> to vector<1x2xf32>
    %32 = math.log %31 : vector<1x2xf32>
    %33 = arith.addf %26, %32 : vector<1x2xf32>
    %34 = vector.shape_cast %33 : vector<1x2xf32> to vector<1x1x2xf32>
    %cst_8 = arith.constant dense<0.000000e+00> : vector<1xf32>
    %35 = vector.multi_reduction <add>, %34, %cst_8 [1, 2] : vector<1x1x2xf32> to vector<1xf32>
    %36 = vector.shape_cast %35 : vector<1xf32> to vector<1x1x1xf32>
    %37 = vector.extract %36[0, 0, 0] : f32 from vector<1x1x1xf32>
    %38 = arith.subf %24, %11 : f32
    %cst_9 = arith.constant 5.000000e-01 : f32
    %39 = arith.mulf %38, %cst_9 : f32
    %40 = arith.subf %37, %11 : f32
    %cst_10 = arith.constant 5.000000e-01 : f32
    %41 = arith.mulf %40, %cst_10 : f32
    %c0_11 = arith.constant 0 : index
    %c0_12 = arith.constant 0 : index
    %42 = vector.load %arg2[%c0_11, %c0_12] : memref<2x128xf32, #tpu.memory_space<vmem>>, vector<2x128xf32>
    %c0_13 = arith.constant 0 : index
    %c0_14 = arith.constant 0 : index
    %43 = vector.load %arg3[%c0_13, %c0_14] : memref<2x128xf32, #tpu.memory_space<vmem>>, vector<2x128xf32>
    %44 = arith.mulf %42, %42 : vector<2x128xf32>
    %cst_15 = arith.constant dense<0.000000e+00> : vector<2xf32>
    %45 = vector.multi_reduction <add>, %44, %cst_15 [1] : vector<2x128xf32> to vector<2xf32>
    %46 = vector.shape_cast %45 : vector<2xf32> to vector<2x1xf32>
    %cst_16 = arith.constant 1.000000e-16 : f32
    %47 = vector.broadcast %cst_16 : f32 to vector<2x1xf32>
    %48 = arith.maximumf %46, %47 : vector<2x1xf32>
    %49 = math.rsqrt %48 : vector<2x1xf32>
    %50 = arith.mulf %43, %43 : vector<2x128xf32>
    %cst_17 = arith.constant dense<0.000000e+00> : vector<2xf32>
    %51 = vector.multi_reduction <add>, %50, %cst_17 [1] : vector<2x128xf32> to vector<2xf32>
    %52 = vector.shape_cast %51 : vector<2xf32> to vector<2x1xf32>
    %cst_18 = arith.constant 1.000000e-16 : f32
    %53 = vector.broadcast %cst_18 : f32 to vector<2x1xf32>
    %54 = arith.maximumf %52, %53 : vector<2x1xf32>
    %55 = math.rsqrt %54 : vector<2x1xf32>
    %56 = vector.broadcast %49 : vector<2x1xf32> to vector<2x128xf32>
    %57 = arith.mulf %42, %56 : vector<2x128xf32>
    %58 = vector.broadcast %55 : vector<2x1xf32> to vector<2x128xf32>
    %59 = arith.mulf %43, %58 : vector<2x128xf32>
    %cst_19 = arith.constant dense<0.000000e+00> : vector<2x2xf32>
    %60 = tpu.matmul %57, %59, %cst_19 {dimension_numbers = #tpu.dot_dimension_numbers<[1], [1], [0], [0], [0, 0, 1, 0], [], []>} : vector<2x128xf32>, vector<2x128xf32>, vector<2x2xf32> -> vector<2x2xf32>
    %cst_20 = arith.constant 1.000000e+01 : f32
    %61 = vector.broadcast %cst_20 : f32 to vector<2x2xf32>
    %62 = arith.mulf %60, %61 : vector<2x2xf32>
    %63 = tpu.iota {dimensions = array<i32: 0>} : vector<2x2xi32>
    %64 = tpu.iota {dimensions = array<i32: 1>} : vector<2x2xi32>
    %65 = arith.cmpi eq, %63, %64 : vector<2x2xi32>
    %cst_21 = arith.constant 0.000000e+00 : f32
    %66 = vector.broadcast %cst_21 : f32 to vector<2x2xf32>
    %67 = arith.select %65, %62, %66 : vector<2x2xi1>, vector<2x2xf32>
    %68 = vector.shape_cast %67 : vector<2x2xf32> to vector<1x2x2xf32>
    %cst_22 = arith.constant dense<0.000000e+00> : vector<1xf32>
    %69 = vector.multi_reduction <add>, %68, %cst_22 [1, 2] : vector<1x2x2xf32> to vector<1xf32>
    %70 = vector.shape_cast %69 : vector<1xf32> to vector<1x1x1xf32>
    %71 = vector.extract %70[0, 0, 0] : f32 from vector<1x1x1xf32>
    %cst_23 = arith.constant dense<0xFF800000> : vector<2xf32>
    %72 = vector.multi_reduction <maximumf>, %62, %cst_23 [1] : vector<2x2xf32> to vector<2xf32>
    %73 = vector.shape_cast %72 : vector<2xf32> to vector<2x1xf32>
    %74 = vector.broadcast %73 : vector<2x1xf32> to vector<2x2xf32>
    %75 = arith.subf %62, %74 : vector<2x2xf32>
    %76 = math.exp %75 : vector<2x2xf32>
    %cst_24 = arith.constant dense<0.000000e+00> : vector<2xf32>
    %77 = vector.multi_reduction <add>, %76, %cst_24 [1] : vector<2x2xf32> to vector<2xf32>
    %78 = vector.shape_cast %77 : vector<2xf32> to vector<2x1xf32>
    %79 = math.log %78 : vector<2x1xf32>
    %80 = arith.addf %73, %79 : vector<2x1xf32>
    %81 = vector.shape_cast %80 : vector<2x1xf32> to vector<1x2x1xf32>
    %cst_25 = arith.constant dense<0.000000e+00> : vector<1xf32>
    %82 = vector.multi_reduction <add>, %81, %cst_25 [1, 2] : vector<1x2x1xf32> to vector<1xf32>
    %83 = vector.shape_cast %82 : vector<1xf32> to vector<1x1x1xf32>
    %84 = vector.extract %83[0, 0, 0] : f32 from vector<1x1x1xf32>
    %cst_26 = arith.constant dense<0xFF800000> : vector<2xf32>
    %85 = vector.multi_reduction <maximumf>, %62, %cst_26 [0] : vector<2x2xf32> to vector<2xf32>
    %86 = vector.shape_cast %85 : vector<2xf32> to vector<1x2xf32>
    %87 = vector.broadcast %86 : vector<1x2xf32> to vector<2x2xf32>
    %88 = arith.subf %62, %87 : vector<2x2xf32>
    %89 = math.exp %88 : vector<2x2xf32>
    %cst_27 = arith.constant dense<0.000000e+00> : vector<2xf32>
    %90 = vector.multi_reduction <add>, %89, %cst_27 [0] : vector<2x2xf32> to vector<2xf32>
    %91 = vector.shape_cast %90 : vector<2xf32> to vector<1x2xf32>
    %92 = math.log %91 : vector<1x2xf32>
    %93 = arith.addf %86, %92 : vector<1x2xf32>
    %94 = vector.shape_cast %93 : vector<1x2xf32> to vector<1x1x2xf32>
    %cst_28 = arith.constant dense<0.000000e+00> : vector<1xf32>
    %95 = vector.multi_reduction <add>, %94, %cst_28 [1, 2] : vector<1x1x2xf32> to vector<1xf32>
    %96 = vector.shape_cast %95 : vector<1xf32> to vector<1x1x1xf32>
    %97 = vector.extract %96[0, 0, 0] : f32 from vector<1x1x1xf32>
    %98 = arith.subf %84, %71 : f32
    %cst_29 = arith.constant 5.000000e-01 : f32
    %99 = arith.mulf %98, %cst_29 : f32
    %100 = arith.subf %97, %71 : f32
    %cst_30 = arith.constant 5.000000e-01 : f32
    %101 = arith.mulf %100, %cst_30 : f32
    %102 = arith.addf %41, %39 : f32
    %cst_31 = arith.constant 1.000000e+00 : f32
    %103 = arith.mulf %102, %cst_31 : f32
    %104 = arith.addf %99, %101 : f32
    %cst_32 = arith.constant 1.000000e+00 : f32
    %105 = arith.mulf %104, %cst_32 : f32
    %106 = arith.addf %103, %105 : f32
    %107 = vector.broadcast %41 : f32 to vector<1x1xf32>
    %108 = vector.broadcast %39 : f32 to vector<1x1xf32>
    %109 = vector.broadcast %99 : f32 to vector<1x1xf32>
    %110 = vector.broadcast %101 : f32 to vector<1x1xf32>
    %111 = vector.broadcast %103 : f32 to vector<1x1xf32>
    %112 = vector.broadcast %105 : f32 to vector<1x1xf32>
    %113 = vector.broadcast %106 : f32 to vector<1x1xf32>
    %cst_33 = arith.constant 0.000000e+00 : f32
    %114 = vector.broadcast %cst_33 : f32 to vector<1x1xf32>
    %115 = tpu.concatenate %107, %108, %109, %110, %111, %112, %113, %114 in 1 : vector<1x1xf32>, vector<1x1xf32>, vector<1x1xf32>, vector<1x1xf32>, vector<1x1xf32>, vector<1x1xf32>, vector<1x1xf32>, vector<1x1xf32> -> vector<1x8xf32>
    %c0_34 = arith.constant 0 : index
    %c0_35 = arith.constant 0 : index
    %116 = vector.load %arg4[%c0_34, %c0_35] : memref<1x8xf32, #tpu.memory_space<vmem>>, vector<1x8xf32>
    tpu.vector_store %arg4[%c0_34, %c0_35], %115 {strides = array<i32>} : memref<1x8xf32, #tpu.memory_space<vmem>>, vector<1x8xf32>,
    return
  }
  func.func @transform_0(%arg0: i32) -> (i32, i32) {
    %c0_i32 = arith.constant 0 : i32
    %c0_i32_0 = arith.constant 0 : i32
    %c0_i32_1 = arith.constant 0 : i32
    return %c0_i32, %c0_i32_0 : i32, i32
  }
  func.func @transform_1(%arg0: i32) -> (i32, i32) {
    %c0_i32 = arith.constant 0 : i32
    %c0_i32_0 = arith.constant 0 : i32
    %c0_i32_1 = arith.constant 0 : i32
    return %c0_i32, %c0_i32_0 : i32, i32
  }
  func.func @transform_2(%arg0: i32) -> (i32, i32) {
    %c0_i32 = arith.constant 0 : i32
    %c0_i32_0 = arith.constant 0 : i32
    %c0_i32_1 = arith.constant 0 : i32
    return %c0_i32, %c0_i32_0 : i32, i32
  }
  func.func @transform_3(%arg0: i32) -> (i32, i32) {
    %c0_i32 = arith.constant 0 : i32
    %c0_i32_0 = arith.constant 0 : i32
    %c0_i32_1 = arith.constant 0 : i32
    return %c0_i32, %c0_i32_0 : i32, i32
  }
}

</mosaic_0001>

<llo_original>
// kernel: _gloria_loss_impl.3
$region0: #{_gloria_loss_impl.3}
  #allocation0 [shape = 'u32[]', space=smem, size = 0x4, offset = 0x4, fixed_abs, tag = 'smem constant byte address 0x4 - core index']
  #allocation1 [shape = 'u32[72,128]{1,0:T(1,128)}', space=vmem, size = 0x9000, scoped, tag = 'internal scratch']
  %s0 = inlined_call_operand.vmem [shape: f32[2,2], index: 0, kind: input, shape index: {}]
  %s1 = inlined_call_operand.vmem [shape: f32[2,128], index: 1, kind: input, shape index: {}]
  %s2 = inlined_call_operand.vmem [shape: f32[2,128], index: 2, kind: input, shape index: {}]
  %s3 = inlined_call_operand.hbm [shape: f32[1,8], index: 3, kind: output, shape index: {}]
  %s4 = sld [smem:[#allocation0]]
  $region22: #{_gloria_loss_impl.3} parent=0
    _
  %s6 = ssub.s32 1, %s4
  %s7 = scalar_select 0, %s6, %s4
  $region1: #{_gloria_loss_impl.3} parent=0
    #allocation2 [shape = 'u8[512]{0}', space=vmem, size = 0x400, scoped, tag = 'output window, operand 0, single buffered']
    #allocation3 [shape = 's32[1]{0}', space=sflag, size = 0x4, scoped, tag = 'scoped memory for _gloria_loss_impl.3']
    %8 = vsyncpa [#allocation3], 0
    // Predicated region
    $region2: #{_gloria_loss_impl.3} parent=1 // pred_check
      _
    $region3: #{_gloria_loss_impl.3} parent=1 // pred_check_branch
      %10 = sbr.rel (0) target = $region5
    $region4: #{_gloria_loss_impl.3} parent=1 // pred_region
      _
    $region5: #{_gloria_loss_impl.3} parent=1 // pred_fallthru
      _
    // Predicated region
    $region6: #{_gloria_loss_impl.3} parent=1 // pred_check
      _
    $region7: #{_gloria_loss_impl.3} parent=1 // pred_check_branch
      %12 = sbr.rel (0) target = $region9
    $region8: #{_gloria_loss_impl.3} parent=1 // pred_region
      _
    $region9: #{_gloria_loss_impl.3} parent=1 // pred_fallthru
      _
    // Predicated region
    $region10: #{_gloria_loss_impl.3} parent=1 // pred_check
      _
    $region11: #{_gloria_loss_impl.3} parent=1 // pred_check_branch
      %14 = sbr.rel (0) target = $region13
    $region12: #{_gloria_loss_impl.3} parent=1 // pred_region
      _
    $region13: #{_gloria_loss_impl.3} parent=1 // pred_fallthru
      _
    %v15 = vld [vmem:[%s0] sm:$0x3]
    %v16 = vmul.f32 %v15, 10.0
    %v17 = vlaneseq
    %v18 = vshrl.u32 %v17, 7
    %v19 = vlaneseq
    %v20 = vand.u32 %v19, 127
    %vm21 = vcmp.eq.s32.totalorder %v18, %v20
    %v22 = vsel %vm21, %v16, 0.0
    %vm23 = vcmask 9216
    %v24 = vsel %vm23, %v22, 0.0
    %25 = vadd.xlane.f32.xlu0 %v24
    %v26 = vpop.xlane.xlu0 %25
    %v27 = vrot.slane %v26, 4
    %v28 = vadd.f32 %v26, %v27
    %v29 = vrot.slane %v28, 2
    %v30 = vadd.f32 %v28, %v29
    %v31 = vrot.slane %v30, 1
    %v32 = vadd.f32 %v30, %v31
    %s33 = vtos %v32
    %v34 = vsel %vm23, %v16, -inf
    %35 = vmax.xlane.f32.xlu0 %v34
    %v36 = vpop.xlane.xlu0 %35
    %v37 = vsub.f32 %v16, %v36
    %v38 = vmul.f32 %v37, 1.442695
    %v39 = vpow.pop %v38
    %v40 = vsel %vm23, %v39, 0.0
    %41 = vadd.xlane.f32.xlu0 %v40
    %v42 = vpop.xlane.xlu0 %41
    %v43 = vlog2.pop %v42
    %v44 = vmul.f32 %v43, 0.6931472
    %v45 = vadd.f32 %v36, %v44
    %vm46 = vcmask 1024
    %v47 = vsel %vm46, %v45, 0.0
    %48 = vadd.xlane.f32.xlu0 %v47
    %v49 = vpop.xlane.xlu0 %48
    %v50 = vrot.slane %v49, 4
    %v51 = vadd.f32 %v49, %v50
    %v52 = vrot.slane %v51, 2
    %v53 = vadd.f32 %v51, %v52
    %v54 = vrot.slane %v53, 1
    %v55 = vadd.f32 %v53, %v54
    %s56 = vtos %v55
    %v57 = vrot.slane %v34, 4
    %v58 = vmax.f32 %v34, %v57
    %v59 = vrot.slane %v58, 2
    %v60 = vmax.f32 %v58, %v59
    %v61 = vrot.slane %v60, 1
    %v62 = vmax.f32 %v60, %v61
    %v63 = vsub.f32 %v16, %v62
    %v64 = vmul.f32 %v63, 1.442695
    %v65 = vpow.pop %v64
    %v66 = vsel %vm23, %v65, 0.0
    %v67 = vrot.slane %v66, 4
    %v68 = vadd.f32 %v66, %v67
    %v69 = vrot.slane %v68, 2
    %v70 = vadd.f32 %v68, %v69
    %v71 = vrot.slane %v70, 1
    %v72 = vadd.f32 %v70, %v71
    %v73 = vlog2.pop %v72
    %v74 = vmul.f32 %v73, 0.6931472
    %v75 = vadd.f32 %v62, %v74
    %vm76 = vcmask 8192
    %v77 = vsel %vm76, %v75, 0.0
    %78 = vadd.xlane.f32.xlu0 %v77
    %v79 = vpop.xlane.xlu0 %78
    %v80 = vrot.slane %v79, 4
    %v81 = vadd.f32 %v79, %v80
    %v82 = vrot.slane %v81, 2
    %v83 = vadd.f32 %v81, %v82
    %v84 = vrot.slane %v83, 1
    %v85 = vadd.f32 %v83, %v84
    %s86 = vtos %v85
    %s87 = ssub.f32 %s56, %s33
    %s88 = smul.f32 %s87, 0.5
    %s89 = ssub.f32 %s86, %s33
    %s90 = smul.f32 %s89, 0.5
    %v91 = vld [vmem:[%s1] sm:$0x3]
    %v92 = vld [vmem:[%s2] sm:$0x3]
    %v93 = vmul.f32 %v91, %v91
    %vm94 = vcmask 1041408
    %v95 = vsel %vm94, %v93, 0.0
    %96 = vadd.xlane.f32.xlu0 %v95
    %v97 = vpop.xlane.xlu0 %96
    %v98 = vmax.f32 %v97, 1e-16
    %v99 = vrsqrt.pop %v98
    %v100 = vmul.f32 %v99, %v98
    %v101 = vmul.f32 %v100, %v99
    %v102 = vmul.f32 0.5, %v101
    %v103 = vsub.f32 1.5, %v102
    %v104 = vmul.f32 %v99, %v103
    %vm105 = vweird.f32 %v98
    %vm106 = vweird.f32 %v99
    %vm107 = vmor %vm105, %vm106
    %v108 = vsel %vm107, %v99, %v104
    %v109 = vmul.f32 %v92, %v92
    %v110 = vsel %vm94, %v109, 0.0
    %111 = vadd.xlane.f32.xlu0 %v110
    %v112 = vpop.xlane.xlu0 %111
    %v113 = vmax.f32 %v112, 1e-16
    %v114 = vrsqrt.pop %v113
    %v115 = vmul.f32 %v114, %v113
    %v116 = vmul.f32 %v115, %v114
    %v117 = vmul.f32 0.5, %v116
    %v118 = vsub.f32 1.5, %v117
    %v119 = vmul.f32 %v114, %v118
    %vm120 = vweird.f32 %v113
    %vm121 = vweird.f32 %v114
    %vm122 = vmor %vm120, %vm121
    %v123 = vsel %vm122, %v114, %v119
    %v124 = vmul.f32 %v91, %v108
    %v125 = vmul.f32 %v92, %v123
    %126 = vmatpush.xpose.msra.mxu0 0.0
    %127 = vmatpush.xpose.msra.mxu0 0.0
    %128 = vmatpush.xpose.msra.mxu0 0.0
    %129 = vmatpush.xpose.msra.mxu0 0.0
    %130 = vmatpush.xpose.msra.mxu0 0.0
    %131 = vmatpush.xpose.msra.mxu0 0.0
    %132 = vmatpush.xpose.msra.mxu0 0.0
    %133 = vmatpush.xpose.msra.mxu0 0.0
    %134 = vmatpush.xpose.msra.mxu0 0.0
    %135 = vmatpush.xpose.msra.mxu0 0.0
    %136 = vmatpush.xpose.msra.mxu0 0.0
    %137 = vmatpush.xpose.msra.mxu0 0.0
    %138 = vmatpush.xpose.msra.mxu0 0.0
    %139 = vmatpush.xpose.msra.mxu0 0.0
    %140 = vmatpush.xpose.msra.mxu0 0.0
    %141 = vmatpush.xpose.msra.mxu0 %v125
    %142 = vmatmul.f32.gmra.mxu0 %v124
    %v143 = vpop.f32.mrf.mxu0
    %v144 = vadd.f32 0.0, %v143
    %145 = vdwg.mxu0
    %v146 = vmul.f32 %v144, 10.0
    %v147 = vsel %vm21, %v146, 0.0
    %v148 = vsel %vm23, %v147, 0.0
    %149 = vadd.xlane.f32.xlu0 %v148
    %v150 = vpop.xlane.xlu0 %149
    %v151 = vrot.slane %v150, 4
    %v152 = vadd.f32 %v150, %v151
    %v153 = vrot.slane %v152, 2
    %v154 = vadd.f32 %v152, %v153
    %v155 = vrot.slane %v154, 1
    %v156 = vadd.f32 %v154, %v155
    %s157 = vtos %v156
    %v158 = vsel %vm23, %v146, -inf
    %159 = vmax.xlane.f32.xlu0 %v158
    %v160 = vpop.xlane.xlu0 %159
    %v161 = vsub.f32 %v146, %v160
    %v162 = vmul.f32 %v161, 1.442695
    %v163 = vpow.pop %v162
    %v164 = vsel %vm23, %v163, 0.0
    %165 = vadd.xlane.f32.xlu0 %v164
    %v166 = vpop.xlane.xlu0 %165
    %v167 = vlog2.pop %v166
    %v168 = vmul.f32 %v167, 0.6931472
    %v169 = vadd.f32 %v160, %v168
    %v170 = vsel %vm46, %v169, 0.0
    %171 = vadd.xlane.f32.xlu0 %v170
    %v172 = vpop.xlane.xlu0 %171
    %v173 = vrot.slane %v172, 4
    %v174 = vadd.f32 %v172, %v173
    %v175 = vrot.slane %v174, 2
    %v176 = vadd.f32 %v174, %v175
    %v177 = vrot.slane %v176, 1
    %v178 = vadd.f32 %v176, %v177
    %s179 = vtos %v178
    %v180 = vrot.slane %v158, 4
    %v181 = vmax.f32 %v158, %v180
    %v182 = vrot.slane %v181, 2
    %v183 = vmax.f32 %v181, %v182
    %v184 = vrot.slane %v183, 1
    %v185 = vmax.f32 %v183, %v184
    %v186 = vsub.f32 %v146, %v185
    %v187 = vmul.f32 %v186, 1.442695
    %v188 = vpow.pop %v187
    %v189 = vsel %vm23, %v188, 0.0
    %v190 = vrot.slane %v189, 4
    %v191 = vadd.f32 %v189, %v190
    %v192 = vrot.slane %v191, 2
    %v193 = vadd.f32 %v191, %v192
    %v194 = vrot.slane %v193, 1
    %v195 = vadd.f32 %v193, %v194
    %v196 = vlog2.pop %v195
    %v197 = vmul.f32 %v196, 0.6931472
    %v198 = vadd.f32 %v185, %v197
    %v199 = vsel %vm76, %v198, 0.0
    %200 = vadd.xlane.f32.xlu0 %v199
    %v201 = vpop.xlane.xlu0 %200
    %v202 = vrot.slane %v201, 4
    %v203 = vadd.f32 %v201, %v202
    %v204 = vrot.slane %v203, 2
    %v205 = vadd.f32 %v203, %v204
    %v206 = vrot.slane %v205, 1
    %v207 = vadd.f32 %v205, %v206
    %s208 = vtos %v207
    %s209 = ssub.f32 %s179, %s157
    %s210 = smul.f32 %s209, 0.5
    %s211 = ssub.f32 %s208, %s157
    %s212 = smul.f32 %s211, 0.5
    %s213 = sadd.f32 %s90, %s88
    %s214 = sadd.f32 %s210, %s212
    %s215 = sadd.f32 %s213, %s214
    %v216 = vstv %s90
    %v217 = vstv %s88
    %v218 = vstv %s210
    %v219 = vstv %s212
    %v220 = vstv %s213
    %v221 = vstv %s214
    %v222 = vstv %s215
    %vm223 = vcmask 7168
    %v224 = vsel %vm223, %v216, %v217
    %vm225 = vcmask 15360
    %v226 = vsel %vm225, %v224, %v218
    %vm227 = vcmask 23552
    %v228 = vsel %vm227, %v226, %v219
    %vm229 = vcmask 31744
    %v230 = vsel %vm229, %v228, %v220
    %vm231 = vcmask 39936
    %v232 = vsel %vm231, %v230, %v221
    %vm233 = vcmask 48128
    %v234 = vsel %vm233, %v232, %v222
    %vm235 = vcmask 56320
    %v236 = vsel %vm235, %v234, 0.0
    %vm237 = vcmask 57344
    %238 = vst.msk [vmem:[#allocation2] sm:$0x1] %vm237, %v236
    // Predicated region
    $region14: #{_gloria_loss_impl.3} parent=1 // pred_check
      _
    $region15: #{_gloria_loss_impl.3} parent=1 // pred_check_branch
      %240 = sbr.rel (0) target = $region17
    $region16: #{_gloria_loss_impl.3} parent=1 // pred_region
      %242 = vsyncadd [#allocation3], 0
      %s244 = sshll.u32 [#allocation2], 4
      %s245 = int_to_ptr.vmem [resolvable:$true] %s244
      %s246 = sshll.u32 %s3, 4
      %s247 = int_to_ptr.hbm [resolvable:$true] %s246
      %249 = dma.vmem_to_hbm [thread:$0]  %s245, 16, %s247, [#allocation3]
    $region17: #{_gloria_loss_impl.3} parent=1 // pred_fallthru
      _
    // Predicated region
    $region18: #{_gloria_loss_impl.3} parent=1 // pred_check
      _
    $region19: #{_gloria_loss_impl.3} parent=1 // pred_check_branch
      %251 = sbr.rel (0) target = $region21
    $region20: #{_gloria_loss_impl.3} parent=1 // pred_region
      %253 = dma.done [#allocation3], 16
    $region21: #{_gloria_loss_impl.3} parent=1 // pred_fallthru
      _
    %254 = vsyncpa [#allocation3], 1

// kernel: _gloria_loss_impl.2
$region0: #{_gloria_loss_impl.2}
  #allocation0 [shape = 'u32[]', space=smem, size = 0x4, offset = 0x4, fixed_abs, tag = 'smem constant byte address 0x4 - core index']
  #allocation1 [shape = 'u32[72,128]{1,0:T(1,128)}', space=vmem, size = 0x9000, scoped, tag = 'internal scratch']
  #allocation2 [shape = 's32[1]{0}', space=sflag, size = 0x4, scoped, tag = 'scoped memory for _gloria_loss_impl.2']
  #allocation3 [shape = 'u8[512]{0}', space=smem, size = 0x200, scoped, tag = 'prefetched SMEM operand 0']
  %s0 = inlined_call_operand.vmem [shape: s32[2], index: 0, kind: input, shape index: {}]
  %s1 = inlined_call_operand.vmem [shape: bf16[2,128,128], index: 1, kind: input, shape index: {}]
  %s2 = inlined_call_operand.vmem [shape: bf16[2,8,128], index: 2, kind: input, shape index: {}]
  %s3 = inlined_call_operand.hbm [shape: f32[2,8,128], index: 3, kind: output, shape index: {0}]
  %s4 = inlined_call_operand.vmem [shape: f32[2,2,1], index: 4, kind: output, shape index: {1}]
  %5 = xla_tuple %s3, %s4
  %s6 = sld [smem:[#allocation0]]
  $region49: #{_gloria_loss_impl.2} parent=0
    _
  %s8 = ssub.s32 1, %s6
  %s9 = scalar_select 0, %s8, %s6
  %s11 = sshll.u32 %s0, 4
  %s12 = int_to_ptr.vmem [resolvable:$true] %s11
  %14 = dma.vmem_to_smem %s12, 16, [#allocation3], [#allocation2]
  %16 = dma.done [#allocation2], 16
  %17 = sfence
  $region1: #{_gloria_loss_impl.2} parent=0
    #allocation4 [shape = 'u8[8192]{0}', space=vmem, size = 0x2000, scoped, tag = 'output window, operand 0']
    #allocation5 [shape = 's32[2]{0}', space=sflag, size = 0x8, scoped, tag = 'scoped memory for _gloria_loss_impl.2']
    %18 = vsyncpa [#allocation5], 0
    %s19 = scalar_lea.sflag [#allocation5], 1
    %20 = vsyncpa %s19, 0
    loop: start=0, step=1, limit=4
    $region2: #{_gloria_loss_impl.2} parent=1 // loop_pre_header
      _
    $region3: #{_gloria_loss_impl.2} parent=1 // loop_header
      %s22 = sphi 0, %s26
      %p23 = scmp.ge.s32.totalorder %s22, 4
      %s30 = sphi 0, %s30
      %s32 = sphi 0, %s30
      %s33 = sphi 0, %s32
      %s47 = sphi 0, %s33
      %s53 = sphi 0, %s55
      %s56 = sphi 0, %s53
      %s57 = sphi 0, %s56
      %s73 = sphi 0, %s57
      %s79 = sphi 0, %s81
      %s82 = sphi 0, %s79
      %s83 = sphi 0, %s82
      %s99 = sphi 0, %s83
      %s105 = sphi 0, %s107
      %s108 = sphi 0, %s105
      %s109 = sphi 0, %s108
      %s125 = sphi 0, %s109
    $region4: #{_gloria_loss_impl.2} parent=1 // loop_header_branch
      %25 = sbr.rel (%p23) target = $region8
    $region5: #{_gloria_loss_impl.2} parent=1 // loop_body
      %s27 = ssub.s32 %s22, 1
      %s28 = ssub.s32 %s22, 2
      %s29 = sadd.s32 %s22, 1
      %s31 = sadd.s32 %s30, 1
      %p34 = scmp.eq.s32.totalorder %s22, 1
      %p35 = scmp.ne.s32.totalorder %s30, %s32
      %p36 = scmp.eq.s32.totalorder %s22, 0
      %p37 = por %p35, %p36
      %p38 = scmp.ne.s32.totalorder %s30, %s32
      %p39 = scmp.eq.s32.totalorder %s27, 1
      %p40 = por %p38, %p39
      %p41 = scmp.ne.s32.totalorder %s32, %s33
      %p42 = scmp.eq.s32.totalorder %s27, 0
      %p43 = por %p41, %p42
      %p44 = scmp.ne.s32.totalorder %s32, %s33
      %p45 = scmp.eq.s32.totalorder %s28, 1
      %p46 = por %p44, %p45
      %p48 = scmp.ne.s32.totalorder %s33, %s47
      %p49 = scmp.eq.s32.totalorder %s28, 0
      %p50 = por %p48, %p49
      %s51 = ssub.s32 %s22, %s29
      %p52 = scmp.eq.s32.totalorder %s51, 0
      %s54 = sadd.s32 %s53, 1
      %s55 = scalar_select %p52, %s53, %s54
      %p58 = pneg %p52
      %p59 = scmp.eq.s32.totalorder %s22, 1
      %p60 = por %p58, %p59
      %p61 = scmp.ne.s32.totalorder %s53, %s56
      %p62 = scmp.eq.s32.totalorder %s22, 0
      %p63 = por %p61, %p62
      %p64 = scmp.ne.s32.totalorder %s53, %s56
      %p65 = scmp.eq.s32.totalorder %s27, 1
      %p66 = por %p64, %p65
      %p67 = scmp.ne.s32.totalorder %s56, %s57
      %p68 = scmp.eq.s32.totalorder %s27, 0
      %p69 = por %p67, %p68
      %p70 = scmp.ne.s32.totalorder %s56, %s57
      %p71 = scmp.eq.s32.totalorder %s28, 1
      %p72 = por %p70, %p71
      %p74 = scmp.ne.s32.totalorder %s57, %s73
      %p75 = scmp.eq.s32.totalorder %s28, 0
      %p76 = por %p74, %p75
      %s77 = ssub.s32 %s22, %s29
      %p78 = scmp.eq.s32.totalorder %s77, 0
      %s80 = sadd.s32 %s79, 1
      %s81 = scalar_select %p78, %s79, %s80
      %p84 = pneg %p78
      %p85 = scmp.eq.s32.totalorder %s22, 1
      %p86 = por %p84, %p85
      %p87 = scmp.ne.s32.totalorder %s79, %s82
      %p88 = scmp.eq.s32.totalorder %s22, 0
      %p89 = por %p87, %p88
      %p90 = scmp.ne.s32.totalorder %s79, %s82
      %p91 = scmp.eq.s32.totalorder %s27, 1
      %p92 = por %p90, %p91
      %p93 = scmp.ne.s32.totalorder %s82, %s83
      %p94 = scmp.eq.s32.totalorder %s27, 0
      %p95 = por %p93, %p94
      %p96 = scmp.ne.s32.totalorder %s82, %s83
      %p97 = scmp.eq.s32.totalorder %s28, 1
      %p98 = por %p96, %p97
      %p100 = scmp.ne.s32.totalorder %s83, %s99
      %p101 = scmp.eq.s32.totalorder %s28, 0
      %p102 = por %p100, %p101
      %s103 = ssub.s32 %s22, %s29
      %p104 = scmp.eq.s32.totalorder %s103, 0
      %s106 = sadd.s32 %s105, 1
      %s107 = scalar_select %p104, %s105, %s106
      %p110 = pneg %p104
      %p111 = scmp.eq.s32.totalorder %s22, 1
      %p112 = por %p110, %p111
      %p113 = scmp.ne.s32.totalorder %s105, %s108
      %p114 = scmp.eq.s32.totalorder %s22, 0
      %p115 = por %p113, %p114
      %p116 = scmp.ne.s32.totalorder %s105, %s108
      %p117 = scmp.eq.s32.totalorder %s27, 1
      %p118 = por %p116, %p117
      %p119 = scmp.ne.s32.totalorder %s108, %s109
      %p120 = scmp.eq.s32.totalorder %s27, 0
      %p121 = por %p119, %p120
      %p122 = scmp.ne.s32.totalorder %s108, %s109
      %p123 = scmp.eq.s32.totalorder %s28, 1
      %p124 = por %p122, %p123
      %p126 = scmp.ne.s32.totalorder %s109, %s125
      %p127 = scmp.eq.s32.totalorder %s28, 0
      %p128 = por %p126, %p127
      %p129 = scmp.le.s32.totalorder 1, %s22
      %p130 = scmp.lt.s32.totalorder %s22, 3
      %p131 = pnand %p129, %p130
      %p132 = pneg %p131
      // Predicated region
      $region9: #{_gloria_loss_impl.2} parent=5 // pred_check
        _
      $region10: #{_gloria_loss_impl.2} parent=5 // pred_check_branch
        %134 = sbr.rel (%p131) target = $region12
      $region11: #{_gloria_loss_impl.2} parent=5 // pred_region
        %s135 = ssub.s32 %s22, 1
        // Predicated region
        $region13: #{_gloria_loss_impl.2} parent=11 // pred_check
          %p136 = pneg %p43
        $region14: #{_gloria_loss_impl.2} parent=11 // pred_check_branch
          %138 = sbr.rel (%p136) target = $region16
        $region15: #{_gloria_loss_impl.2} parent=11 // pred_region
          _
        $region16: #{_gloria_loss_impl.2} parent=11 // pred_fallthru
          _
      $region12: #{_gloria_loss_impl.2} parent=5 // pred_fallthru
        _
      %p139 = scmp.lt.s32.totalorder %s22, 2
      // Predicated region
      $region17: #{_gloria_loss_impl.2} parent=5 // pred_check
        %p140 = pneg %p139
      $region18: #{_gloria_loss_impl.2} parent=5 // pred_check_branch
        %142 = sbr.rel (%p140) target = $region20
      $region19: #{_gloria_loss_impl.2} parent=5 // pred_region
        // Predicated region
        $region21: #{_gloria_loss_impl.2} parent=19 // pred_check
          %p143 = pneg %p63
        $region22: #{_gloria_loss_impl.2} parent=19 // pred_check_branch
          %145 = sbr.rel (%p143) target = $region24
        $region23: #{_gloria_loss_impl.2} parent=19 // pred_region
          %p146 = scmp.lt.s32.totalorder %s22, 1
          %s147 = scalar_select %p146, %s22, 1
          %s148 = smul.addr %s147, 4
          %s149 = scalar_lea.vmem %s2, %s148
        $region24: #{_gloria_loss_impl.2} parent=19 // pred_fallthru
          _
      $region20: #{_gloria_loss_impl.2} parent=5 // pred_fallthru
        _
      %p150 = scmp.le.s32.totalorder 1, %s22
      %p151 = scmp.lt.s32.totalorder %s22, 3
      %p152 = pnand %p150, %p151
      %p153 = pneg %p152
      // Predicated region
      $region25: #{_gloria_loss_impl.2} parent=5 // pred_check
        _
      $region26: #{_gloria_loss_impl.2} parent=5 // pred_check_branch
        %155 = sbr.rel (%p152) target = $region28
      $region27: #{_gloria_loss_impl.2} parent=5 // pred_region
        %s156 = ssub.s32 %s22, 1
        %p157 = pneg %p43
        %p158 = pneg %p40
        %p159 = scmp.lt.s32.totalorder %s27, 1
        %s160 = scalar_select %p159, %s27, 1
        %s161 = smul.addr %s160, 4
        %s162 = scalar_lea.vmem %s2, %s161
        %p163 = pneg %p69
        %p164 = pneg %p66
        %p165 = pneg %p95
        %p166 = pneg %p92
        %s167 = sand.u32 %s82, 1
        %s168 = scalar_lea.sflag [#allocation5], %s167
        %s169 = sand.u32 %s82, 1
        %s170 = smul.addr %s169, 8
        %s171 = scalar_lea.vmem [#allocation4], %s170
        %p172 = pneg %p121
        %p173 = pneg %p118
        %p174 = scmp.lt.s32.totalorder %s27, 1
        %s175 = scalar_select %p174, %s27, 1
        %s176 = smul.addr %s175, 2
        %s177 = scalar_lea.vmem %s4, %s176
        %p178 = scmp.lt.s32.totalorder %s27, 1
        %s179 = scalar_select %p178, %s27, 1
        %s180 = smul.addr %s179, 4
        %s181 = scalar_lea.vmem %s2, %s180
        %p182 = scmp.lt.s32.totalorder %s27, 1
        %s183 = scalar_select %p182, %s27, 1
        %s184 = smul.addr %s183, 2
        %s185 = scalar_lea.vmem %s4, %s184
        %s187 = sld [smem:[#allocation3 + %s27]]
        %v188 = vld [vmem:[%s181] sm:$0xf]
        %v189 = vunpack.c.l.bf16 %v188
        %v190 = vlaneseq
        %v191 = vand.u32 %v190, 127
        %v192 = vstv %s187
        %vm193 = vcmp.lt.s32.totalorder %v191, %v192
        %v194 = vlaneseq
        %v195 = vshrl.u32 %v194, 7
        %vm196 = vcmp.lt.s32.totalorder %v195, %v192
        %vm197 = vcmp.lt.s32.totalorder %v191, 16
        %v198 = vld [vmem:[%s1] sm:$0xf]
        %v199 = vld [vmem:[%s1 + $0x4] sm:$0xf]
        %v200 = vld [vmem:[%s1 + $0x8] sm:$0xf]
        %v201 = vld [vmem:[%s1 + $0xc] sm:$0xf]
        %v202 = vld [vmem:[%s1 + $0x10] sm:$0xf]
        %v203 = vld [vmem:[%s1 + $0x14] sm:$0xf]
        %v204 = vld [vmem:[%s1 + $0x18] sm:$0xf]
        %v205 = vld [vmem:[%s1 + $0x1c] sm:$0xf]
        %v206 = vld [vmem:[%s1 + $0x20] sm:$0xf]
        %v207 = vld [vmem:[%s1 + $0x24] sm:$0xf]
        %v208 = vld [vmem:[%s1 + $0x28] sm:$0xf]
        %v209 = vld [vmem:[%s1 + $0x2c] sm:$0xf]
        %v210 = vld [vmem:[%s1 + $0x30] sm:$0xf]
        %v211 = vld [vmem:[%s1 + $0x34] sm:$0xf]
        %v212 = vld [vmem:[%s1 + $0x38] sm:$0xf]
        %v213 = vld [vmem:[%s1 + $0x3c] sm:$0xf]
        %v214 = vld [vmem:[%s1 + $0x40] sm:$0xf]
        %v215 = vld [vmem:[%s1 + $0x44] sm:$0xf]
        %v216 = vld [vmem:[%s1 + $0x48] sm:$0xf]
        %v217 = vld [vmem:[%s1 + $0x4c] sm:$0xf]
        %v218 = vld [vmem:[%s1 + $0x50] sm:$0xf]
        %v219 = vld [vmem:[%s1 + $0x54] sm:$0xf]
        %v220 = vld [vmem:[%s1 + $0x58] sm:$0xf]
        %v221 = vld [vmem:[%s1 + $0x5c] sm:$0xf]
        %v222 = vld [vmem:[%s1 + $0x60] sm:$0xf]
        %v223 = vld [vmem:[%s1 + $0x64] sm:$0xf]
        %v224 = vld [vmem:[%s1 + $0x68] sm:$0xf]
        %v225 = vld [vmem:[%s1 + $0x6c] sm:$0xf]
        %v226 = vld [vmem:[%s1 + $0x70] sm:$0xf]
        %v227 = vld [vmem:[%s1 + $0x74] sm:$0xf]
        %v228 = vld [vmem:[%s1 + $0x78] sm:$0xf]
        %v229 = vld [vmem:[%s1 + $0x7c] sm:$0xf]
        %v262 = vunpack.c.l.b16 %v198
        %v263 = vunpack.c.l.b16 %v199
        %v264 = vunpack.c.l.b16 %v200
        %v265 = vunpack.c.l.b16 %v201
        %v266 = vunpack.c.l.b16 %v202
        %v267 = vunpack.c.l.b16 %v203
        %v268 = vunpack.c.l.b16 %v204
        %v269 = vunpack.c.l.b16 %v205
        %v270 = vunpack.c.l.b16 %v206
        %v271 = vunpack.c.l.b16 %v207
        %v272 = vunpack.c.l.b16 %v208
        %v273 = vunpack.c.l.b16 %v209
        %v274 = vunpack.c.l.b16 %v210
        %v275 = vunpack.c.l.b16 %v211
        %v276 = vunpack.c.l.b16 %v212
        %v277 = vunpack.c.l.b16 %v213
        %v278 = vunpack.c.l.b16 %v214
        %v279 = vunpack.c.l.b16 %v215
        %v280 = vunpack.c.l.b16 %v216
        %v281 = vunpack.c.l.b16 %v217
        %v282 = vunpack.c.l.b16 %v218
        %v283 = vunpack.c.l.b16 %v219
        %v284 = vunpack.c.l.b16 %v220
        %v285 = vunpack.c.l.b16 %v221
        %v286 = vunpack.c.l.b16 %v222
        %v287 = vunpack.c.l.b16 %v223
        %v288 = vunpack.c.l.b16 %v224
        %v289 = vunpack.c.l.b16 %v225
        %v290 = vunpack.c.l.b16 %v226
        %v291 = vunpack.c.l.b16 %v227
        %v292 = vunpack.c.l.b16 %v228
        %v293 = vunpack.c.l.b16 %v229
        %v294 = vpack.c.b16 %v263, %v262
        %v295 = vpack.c.b16 %v265, %v264
        %v296 = vpack.c.b16 %v267, %v266
        %v297 = vpack.c.b16 %v269, %v268
        %v298 = vpack.c.b16 %v271, %v270
        %v299 = vpack.c.b16 %v273, %v272
        %v300 = vpack.c.b16 %v275, %v274
        %v301 = vpack.c.b16 %v277, %v276
        %v302 = vpack.c.b16 %v279, %v278
        %v303 = vpack.c.b16 %v281, %v280
        %v304 = vpack.c.b16 %v283, %v282
        %v305 = vpack.c.b16 %v285, %v284
        %v306 = vpack.c.b16 %v287, %v286
        %v307 = vpack.c.b16 %v289, %v288
        %v308 = vpack.c.b16 %v291, %v290
        %v309 = vpack.c.b16 %v293, %v292
        %326 = vmatpush.bf16.xpose.msra.mxu0 0
        %327 = vmatpush.bf16.xpose.msra.mxu0 0
        %328 = vmatpush.bf16.xpose.msra.mxu0 0
        %329 = vmatpush.bf16.xpose.msra.mxu0 0
        %330 = vmatpush.bf16.xpose.msra.mxu0 0
        %331 = vmatpush.bf16.xpose.msra.mxu0 0
        %332 = vmatpush.bf16.xpose.msra.mxu0 0
        %333 = vmatpush.bf16.xpose.msra.mxu0 %v188
        %334 = vmatmul.bf16.gmra.mxu0 %v294
        %v335 = vpop.f32.mrf.mxu0
        %v336 = vadd.f32 0.0, %v335
        %v337 = vpop.f32.mrf.mxu0
        %v338 = vadd.f32 0.0, %v337
        %339 = vmatmul.bf16.gmra.mxu0 %v295
        %v340 = vpop.f32.mrf.mxu0
        %v341 = vadd.f32 0.0, %v340
        %v342 = vpop.f32.mrf.mxu0
        %v343 = vadd.f32 0.0, %v342
        %344 = vmatmul.bf16.gmra.mxu0 %v296
        %v345 = vpop.f32.mrf.mxu0
        %v346 = vadd.f32 0.0, %v345
        %v347 = vpop.f32.mrf.mxu0
        %v348 = vadd.f32 0.0, %v347
        %349 = vmatmul.bf16.gmra.mxu0 %v297
        %v350 = vpop.f32.mrf.mxu0
        %v351 = vadd.f32 0.0, %v350
        %v352 = vpop.f32.mrf.mxu0
        %v353 = vadd.f32 0.0, %v352
        %354 = vmatmul.bf16.gmra.mxu0 %v298
        %v355 = vpop.f32.mrf.mxu0
        %v356 = vadd.f32 0.0, %v355
        %v357 = vpop.f32.mrf.mxu0
        %v358 = vadd.f32 0.0, %v357
        %359 = vmatmul.bf16.gmra.mxu0 %v299
        %v360 = vpop.f32.mrf.mxu0
        %v361 = vadd.f32 0.0, %v360
        %v362 = vpop.f32.mrf.mxu0
        %v363 = vadd.f32 0.0, %v362
        %364 = vmatmul.bf16.gmra.mxu0 %v300
        %v365 = vpop.f32.mrf.mxu0
        %v366 = vadd.f32 0.0, %v365
        %v367 = vpop.f32.mrf.mxu0
        %v368 = vadd.f32 0.0, %v367
        %369 = vmatmul.bf16.gmra.mxu0 %v301
        %v370 = vpop.f32.mrf.mxu0
        %v371 = vadd.f32 0.0, %v370
        %v372 = vpop.f32.mrf.mxu0
        %v373 = vadd.f32 0.0, %v372
        %374 = vmatmul.bf16.gmra.mxu0 %v302
        %v375 = vpop.f32.mrf.mxu0
        %v376 = vadd.f32 0.0, %v375
        %v377 = vpop.f32.mrf.mxu0
        %v378 = vadd.f32 0.0, %v377
        %379 = vmatmul.bf16.gmra.mxu0 %v303
        %v380 = vpop.f32.mrf.mxu0
        %v381 = vadd.f32 0.0, %v380
        %v382 = vpop.f32.mrf.mxu0
        %v383 = vadd.f32 0.0, %v382
        %384 = vmatmul.bf16.gmra.mxu0 %v304
        %v385 = vpop.f32.mrf.mxu0
        %v386 = vadd.f32 0.0, %v385
        %v387 = vpop.f32.mrf.mxu0
        %v388 = vadd.f32 0.0, %v387
        %389 = vmatmul.bf16.gmra.mxu0 %v305
        %v390 = vpop.f32.mrf.mxu0
        %v391 = vadd.f32 0.0, %v390
        %v392 = vpop.f32.mrf.mxu0
        %v393 = vadd.f32 0.0, %v392
        %394 = vmatmul.bf16.gmra.mxu0 %v306
        %v395 = vpop.f32.mrf.mxu0
        %v396 = vadd.f32 0.0, %v395
        %v397 = vpop.f32.mrf.mxu0
        %v398 = vadd.f32 0.0, %v397
        %399 = vmatmul.bf16.gmra.mxu0 %v307
        %v400 = vpop.f32.mrf.mxu0
        %v401 = vadd.f32 0.0, %v400
        %v402 = vpop.f32.mrf.mxu0
        %v403 = vadd.f32 0.0, %v402
        %404 = vmatmul.bf16.gmra.mxu0 %v308
        %v405 = vpop.f32.mrf.mxu0
        %v406 = vadd.f32 0.0, %v405
        %v407 = vpop.f32.mrf.mxu0
        %v408 = vadd.f32 0.0, %v407
        %409 = vmatmul.bf16.gmra.mxu0 %v309
        %v410 = vpop.f32.mrf.mxu0
        %v411 = vadd.f32 0.0, %v410
        %v412 = vpop.f32.mrf.mxu0
        %v413 = vadd.f32 0.0, %v412
        %414 = vdwg.mxu0
        %v415 = vsel %vm193, 1, 0
        %vm416 = vcmp.eq.s32.totalorder %v415, 1
        %v417 = vsel %vm416, %v336, -1e+30
        %v418 = vsel %vm416, %v338, -1e+30
        %v419 = vsel %vm416, %v341, -1e+30
        %v420 = vsel %vm416, %v343, -1e+30
        %v421 = vsel %vm416, %v346, -1e+30
        %v422 = vsel %vm416, %v348, -1e+30
        %v423 = vsel %vm416, %v351, -1e+30
        %v424 = vsel %vm416, %v353, -1e+30
        %v425 = vsel %vm416, %v356, -1e+30
        %v426 = vsel %vm416, %v358, -1e+30
        %v427 = vsel %vm416, %v361, -1e+30
        %v428 = vsel %vm416, %v363, -1e+30
        %v429 = vsel %vm416, %v366, -1e+30
        %v430 = vsel %vm416, %v368, -1e+30
        %v431 = vsel %vm416, %v371, -1e+30
        %v432 = vsel %vm416, %v373, -1e+30
        %v433 = vsel %vm416, %v376, -1e+30
        %v434 = vsel %vm416, %v378, -1e+30
        %v435 = vsel %vm416, %v381, -1e+30
        %v436 = vsel %vm416, %v383, -1e+30
        %v437 = vsel %vm416, %v386, -1e+30
        %v438 = vsel %vm416, %v388, -1e+30
        %v439 = vsel %vm416, %v391, -1e+30
        %v440 = vsel %vm416, %v393, -1e+30
        %v441 = vsel %vm416, %v396, -1e+30
        %v442 = vsel %vm416, %v398, -1e+30
        %v443 = vsel %vm416, %v401, -1e+30
        %v444 = vsel %vm416, %v403, -1e+30
        %v445 = vsel %vm416, %v406, -1e+30
        %v446 = vsel %vm416, %v408, -1e+30
        %v447 = vsel %vm416, %v411, -1e+30
        %v448 = vsel %vm416, %v413, -1e+30
        %vm449 = vcmask 64512
        %v450 = vsel %vm449, %v417, -inf
        %451 = vmax.xlane.f32.xlu0 %v450
        %v452 = vpop.xlane.xlu0 %451
        %v453 = vsel %vm449, %v418, -inf
        %454 = vmax.xlane.f32.xlu0 %v453
        %v455 = vpop.xlane.xlu0 %454
        %v456 = vsel %vm449, %v419, -inf
        %457 = vmax.xlane.f32.xlu0 %v456
        %v458 = vpop.xlane.xlu0 %457
        %v459 = vsel %vm449, %v420, -inf
        %460 = vmax.xlane.f32.xlu0 %v459
        %v461 = vpop.xlane.xlu0 %460
        %v462 = vsel %vm449, %v421, -inf
        %463 = vmax.xlane.f32.xlu0 %v462
        %v464 = vpop.xlane.xlu0 %463
        %v465 = vsel %vm449, %v422, -inf
        %466 = vmax.xlane.f32.xlu0 %v465
        %v467 = vpop.xlane.xlu0 %466
        %v468 = vsel %vm449, %v423, -inf
        %469 = vmax.xlane.f32.xlu0 %v468
        %v470 = vpop.xlane.xlu0 %469
        %v471 = vsel %vm449, %v424, -inf
        %472 = vmax.xlane.f32.xlu0 %v471
        %v473 = vpop.xlane.xlu0 %472
        %v474 = vsel %vm449, %v425, -inf
        %475 = vmax.xlane.f32.xlu0 %v474
        %v476 = vpop.xlane.xlu0 %475
        %v477 = vsel %vm449, %v426, -inf
        %478 = vmax.xlane.f32.xlu0 %v477
        %v479 = vpop.xlane.xlu0 %478
        %v480 = vsel %vm449, %v427, -inf
        %481 = vmax.xlane.f32.xlu0 %v480
        %v482 = vpop.xlane.xlu0 %481
        %v483 = vsel %vm449, %v428, -inf
        %484 = vmax.xlane.f32.xlu0 %v483
        %v485 = vpop.xlane.xlu0 %484
        %v486 = vsel %vm449, %v429, -inf
        %487 = vmax.xlane.f32.xlu0 %v486
        %v488 = vpop.xlane.xlu0 %487
        %v489 = vsel %vm449, %v430, -inf
        %490 = vmax.xlane.f32.xlu0 %v489
        %v491 = vpop.xlane.xlu0 %490
        %v492 = vsel %vm449, %v431, -inf
        %493 = vmax.xlane.f32.xlu0 %v492
        %v494 = vpop.xlane.xlu0 %493
        %v495 = vsel %vm449, %v432, -inf
        %496 = vmax.xlane.f32.xlu0 %v495
        %v497 = vpop.xlane.xlu0 %496
        %v498 = vsel %vm449, %v433, -inf
        %499 = vmax.xlane.f32.xlu0 %v498
        %v500 = vpop.xlane.xlu0 %499
        %v501 = vsel %vm449, %v434, -inf
        %502 = vmax.xlane.f32.xlu0 %v501
        %v503 = vpop.xlane.xlu0 %502
        %v504 = vsel %vm449, %v435, -inf
        %505 = vmax.xlane.f32.xlu0 %v504
        %v506 = vpop.xlane.xlu0 %505
        %v507 = vsel %vm449, %v436, -inf
        %508 = vmax.xlane.f32.xlu0 %v507
        %v509 = vpop.xlane.xlu0 %508
        %v510 = vsel %vm449, %v437, -inf
        %511 = vmax.xlane.f32.xlu0 %v510
        %v512 = vpop.xlane.xlu0 %511
        %v513 = vsel %vm449, %v438, -inf
        %514 = vmax.xlane.f32.xlu0 %v513
        %v515 = vpop.xlane.xlu0 %514
        %v516 = vsel %vm449, %v439, -inf
        %517 = vmax.xlane.f32.xlu0 %v516
        %v518 = vpop.xlane.xlu0 %517
        %v519 = vsel %vm449, %v440, -inf
        %520 = vmax.xlane.f32.xlu0 %v519
        %v521 = vpop.xlane.xlu0 %520
        %v522 = vsel %vm449, %v441, -inf
        %523 = vmax.xlane.f32.xlu0 %v522
        %v524 = vpop.xlane.xlu0 %523
        %v525 = vsel %vm449, %v442, -inf
        %526 = vmax.xlane.f32.xlu0 %v525
        %v527 = vpop.xlane.xlu0 %526
        %v528 = vsel %vm449, %v443, -inf
        %529 = vmax.xlane.f32.xlu0 %v528
        %v530 = vpop.xlane.xlu0 %529
        %v531 = vsel %vm449, %v444, -inf
        %532 = vmax.xlane.f32.xlu0 %v531
        %v533 = vpop.xlane.xlu0 %532
        %v534 = vsel %vm449, %v445, -inf
        %535 = vmax.xlane.f32.xlu0 %v534
        %v536 = vpop.xlane.xlu0 %535
        %v537 = vsel %vm449, %v446, -inf
        %538 = vmax.xlane.f32.xlu0 %v537
        %v539 = vpop.xlane.xlu0 %538
        %v540 = vsel %vm449, %v447, -inf
        %541 = vmax.xlane.f32.xlu0 %v540
        %v542 = vpop.xlane.xlu0 %541
        %v543 = vsel %vm449, %v448, -inf
        %544 = vmax.xlane.f32.xlu0 %v543
        %v545 = vpop.xlane.xlu0 %544
        %v546 = vsub.f32 %v417, %v452
        %v547 = vsub.f32 %v418, %v455
        %v548 = vsub.f32 %v419, %v458
        %v549 = vsub.f32 %v420, %v461
        %v550 = vsub.f32 %v421, %v464
        %v551 = vsub.f32 %v422, %v467
        %v552 = vsub.f32 %v423, %v470
        %v553 = vsub.f32 %v424, %v473
        %v554 = vsub.f32 %v425, %v476
        %v555 = vsub.f32 %v426, %v479
        %v556 = vsub.f32 %v427, %v482
        %v557 = vsub.f32 %v428, %v485
        %v558 = vsub.f32 %v429, %v488
        %v559 = vsub.f32 %v430, %v491
        %v560 = vsub.f32 %v431, %v494
        %v561 = vsub.f32 %v432, %v497
        %v562 = vsub.f32 %v433, %v500
        %v563 = vsub.f32 %v434, %v503
        %v564 = vsub.f32 %v435, %v506
        %v565 = vsub.f32 %v436, %v509
        %v566 = vsub.f32 %v437, %v512
        %v567 = vsub.f32 %v438, %v515
        %v568 = vsub.f32 %v439, %v518
        %v569 = vsub.f32 %v440, %v521
        %v570 = vsub.f32 %v441, %v524
        %v571 = vsub.f32 %v442, %v527
        %v572 = vsub.f32 %v443, %v530
        %v573 = vsub.f32 %v444, %v533
        %v574 = vsub.f32 %v445, %v536
        %v575 = vsub.f32 %v446, %v539
        %v576 = vsub.f32 %v447, %v542
        %v577 = vsub.f32 %v448, %v545
        %v578 = vmul.f32 %v546, 1.442695
        %v579 = vpow.pop %v578
        %v580 = vmul.f32 %v547, 1.442695
        %v581 = vpow.pop %v580
        %v582 = vmul.f32 %v548, 1.442695
        %v583 = vpow.pop %v582
        %v584 = vmul.f32 %v549, 1.442695
        %v585 = vpow.pop %v584
        %v586 = vmul.f32 %v550, 1.442695
        %v587 = vpow.pop %v586
        %v588 = vmul.f32 %v551, 1.442695
        %v589 = vpow.pop %v588
        %v590 = vmul.f32 %v552, 1.442695
        %v591 = vpow.pop %v590
        %v592 = vmul.f32 %v553, 1.442695
        %v593 = vpow.pop %v592
        %v594 = vmul.f32 %v554, 1.442695
        %v595 = vpow.pop %v594
        %v596 = vmul.f32 %v555, 1.442695
        %v597 = vpow.pop %v596
        %v598 = vmul.f32 %v556, 1.442695
        %v599 = vpow.pop %v598
        %v600 = vmul.f32 %v557, 1.442695
        %v601 = vpow.pop %v600
        %v602 = vmul.f32 %v558, 1.442695
        %v603 = vpow.pop %v602
        %v604 = vmul.f32 %v559, 1.442695
        %v605 = vpow.pop %v604
        %v606 = vmul.f32 %v560, 1.442695
        %v607 = vpow.pop %v606
        %v608 = vmul.f32 %v561, 1.442695
        %v609 = vpow.pop %v608
        %v610 = vmul.f32 %v562, 1.442695
        %v611 = vpow.pop %v610
        %v612 = vmul.f32 %v563, 1.442695
        %v613 = vpow.pop %v612
        %v614 = vmul.f32 %v564, 1.442695
        %v615 = vpow.pop %v614
        %v616 = vmul.f32 %v565, 1.442695
        %v617 = vpow.pop %v616
        %v618 = vmul.f32 %v566, 1.442695
        %v619 = vpow.pop %v618
        %v620 = vmul.f32 %v567, 1.442695
        %v621 = vpow.pop %v620
        %v622 = vmul.f32 %v568, 1.442695
        %v623 = vpow.pop %v622
        %v624 = vmul.f32 %v569, 1.442695
        %v625 = vpow.pop %v624
        %v626 = vmul.f32 %v570, 1.442695
        %v627 = vpow.pop %v626
        %v628 = vmul.f32 %v571, 1.442695
        %v629 = vpow.pop %v628
        %v630 = vmul.f32 %v572, 1.442695
        %v631 = vpow.pop %v630
        %v632 = vmul.f32 %v573, 1.442695
        %v633 = vpow.pop %v632
        %v634 = vmul.f32 %v574, 1.442695
        %v635 = vpow.pop %v634
        %v636 = vmul.f32 %v575, 1.442695
        %v637 = vpow.pop %v636
        %v638 = vmul.f32 %v576, 1.442695
        %v639 = vpow.pop %v638
        %v640 = vmul.f32 %v577, 1.442695
        %v641 = vpow.pop %v640
        %v642 = vsel %vm449, %v579, 0.0
        %643 = vadd.xlane.f32.xlu0 %v642
        %v644 = vpop.xlane.xlu0 %643
        %v645 = vsel %vm449, %v581, 0.0
        %646 = vadd.xlane.f32.xlu0 %v645
        %v647 = vpop.xlane.xlu0 %646
        %v648 = vsel %vm449, %v583, 0.0
        %649 = vadd.xlane.f32.xlu0 %v648
        %v650 = vpop.xlane.xlu0 %649
        %v651 = vsel %vm449, %v585, 0.0
        %652 = vadd.xlane.f32.xlu0 %v651
        %v653 = vpop.xlane.xlu0 %652
        %v654 = vsel %vm449, %v587, 0.0
        %655 = vadd.xlane.f32.xlu0 %v654
        %v656 = vpop.xlane.xlu0 %655
        %v657 = vsel %vm449, %v589, 0.0
        %658 = vadd.xlane.f32.xlu0 %v657
        %v659 = vpop.xlane.xlu0 %658
        %v660 = vsel %vm449, %v591, 0.0
        %661 = vadd.xlane.f32.xlu0 %v660
        %v662 = vpop.xlane.xlu0 %661
        %v663 = vsel %vm449, %v593, 0.0
        %664 = vadd.xlane.f32.xlu0 %v663
        %v665 = vpop.xlane.xlu0 %664
        %v666 = vsel %vm449, %v595, 0.0
        %667 = vadd.xlane.f32.xlu0 %v666
        %v668 = vpop.xlane.xlu0 %667
        %v669 = vsel %vm449, %v597, 0.0
        %670 = vadd.xlane.f32.xlu0 %v669
        %v671 = vpop.xlane.xlu0 %670
        %v672 = vsel %vm449, %v599, 0.0
        %673 = vadd.xlane.f32.xlu0 %v672
        %v674 = vpop.xlane.xlu0 %673
        %v675 = vsel %vm449, %v601, 0.0
        %676 = vadd.xlane.f32.xlu0 %v675
        %v677 = vpop.xlane.xlu0 %676
        %v678 = vsel %vm449, %v603, 0.0
        %679 = vadd.xlane.f32.xlu0 %v678
        %v680 = vpop.xlane.xlu0 %679
        %v681 = vsel %vm449, %v605, 0.0
        %682 = vadd.xlane.f32.xlu0 %v681
        %v683 = vpop.xlane.xlu0 %682
        %v684 = vsel %vm449, %v607, 0.0
        %685 = vadd.xlane.f32.xlu0 %v684
        %v686 = vpop.xlane.xlu0 %685
        %v687 = vsel %vm449, %v609, 0.0
        %688 = vadd.xlane.f32.xlu0 %v687
        %v689 = vpop.xlane.xlu0 %688
        %v690 = vsel %vm449, %v611, 0.0
        %691 = vadd.xlane.f32.xlu0 %v690
        %v692 = vpop.xlane.xlu0 %691
        %v693 = vsel %vm449, %v613, 0.0
        %694 = vadd.xlane.f32.xlu0 %v693
        %v695 = vpop.xlane.xlu0 %694
        %v696 = vsel %vm449, %v615, 0.0
        %697 = vadd.xlane.f32.xlu0 %v696
        %v698 = vpop.xlane.xlu0 %697
        %v699 = vsel %vm449, %v617, 0.0
        %700 = vadd.xlane.f32.xlu0 %v699
        %v701 = vpop.xlane.xlu0 %700
        %v702 = vsel %vm449, %v619, 0.0
        %703 = vadd.xlane.f32.xlu0 %v702
        %v704 = vpop.xlane.xlu0 %703
        %v705 = vsel %vm449, %v621, 0.0
        %706 = vadd.xlane.f32.xlu0 %v705
        %v707 = vpop.xlane.xlu0 %706
        %v708 = vsel %vm449, %v623, 0.0
        %709 = vadd.xlane.f32.xlu0 %v708
        %v710 = vpop.xlane.xlu0 %709
        %v711 = vsel %vm449, %v625, 0.0
        %712 = vadd.xlane.f32.xlu0 %v711
        %v713 = vpop.xlane.xlu0 %712
        %v714 = vsel %vm449, %v627, 0.0
        %715 = vadd.xlane.f32.xlu0 %v714
        %v716 = vpop.xlane.xlu0 %715
        %v717 = vsel %vm449, %v629, 0.0
        %718 = vadd.xlane.f32.xlu0 %v717
        %v719 = vpop.xlane.xlu0 %718
        %v720 = vsel %vm449, %v631, 0.0
        %721 = vadd.xlane.f32.xlu0 %v720
        %v722 = vpop.xlane.xlu0 %721
        %v723 = vsel %vm449, %v633, 0.0
        %724 = vadd.xlane.f32.xlu0 %v723
        %v725 = vpop.xlane.xlu0 %724
        %v726 = vsel %vm449, %v635, 0.0
        %727 = vadd.xlane.f32.xlu0 %v726
        %v728 = vpop.xlane.xlu0 %727
        %v729 = vsel %vm449, %v637, 0.0
        %730 = vadd.xlane.f32.xlu0 %v729
        %v731 = vpop.xlane.xlu0 %730
        %v732 = vsel %vm449, %v639, 0.0
        %733 = vadd.xlane.f32.xlu0 %v732
        %v734 = vpop.xlane.xlu0 %733
        %v735 = vsel %vm449, %v641, 0.0
        %736 = vadd.xlane.f32.xlu0 %v735
        %v737 = vpop.xlane.xlu0 %736
        %v738 = vrcp.pop %v644
        %v739 = vrcp.pop %v647
        %v740 = vrcp.pop %v650
        %v741 = vrcp.pop %v653
        %v742 = vrcp.pop %v656
        %v743 = vrcp.pop %v659
        %v744 = vrcp.pop %v662
        %v745 = vrcp.pop %v665
        %v746 = vrcp.pop %v668
        %v747 = vrcp.pop %v671
        %v748 = vrcp.pop %v674
        %v749 = vrcp.pop %v677
        %v750 = vrcp.pop %v680
        %v751 = vrcp.pop %v683
        %v752 = vrcp.pop %v686
        %v753 = vrcp.pop %v689
        %v754 = vrcp.pop %v692
        %v755 = vrcp.pop %v695
        %v756 = vrcp.pop %v698
        %v757 = vrcp.pop %v701
        %v758 = vrcp.pop %v704
        %v759 = vrcp.pop %v707
        %v760 = vrcp.pop %v710
        %v761 = vrcp.pop %v713
        %v762 = vrcp.pop %v716
        %v763 = vrcp.pop %v719
        %v764 = vrcp.pop %v722
        %v765 = vrcp.pop %v725
        %v766 = vrcp.pop %v728
        %v767 = vrcp.pop %v731
        %v768 = vrcp.pop %v734
        %v769 = vrcp.pop %v737
        %v770 = vmul.f32 %v579, %v738
        %v771 = vmul.f32 %v581, %v739
        %v772 = vmul.f32 %v583, %v740
        %v773 = vmul.f32 %v585, %v741
        %v774 = vmul.f32 %v587, %v742
        %v775 = vmul.f32 %v589, %v743
        %v776 = vmul.f32 %v591, %v744
        %v777 = vmul.f32 %v593, %v745
        %v778 = vmul.f32 %v595, %v746
        %v779 = vmul.f32 %v597, %v747
        %v780 = vmul.f32 %v599, %v748
        %v781 = vmul.f32 %v601, %v749
        %v782 = vmul.f32 %v603, %v750
        %v783 = vmul.f32 %v605, %v751
        %v784 = vmul.f32 %v607, %v752
        %v785 = vmul.f32 %v609, %v753
        %v786 = vmul.f32 %v611, %v754
        %v787 = vmul.f32 %v613, %v755
        %v788 = vmul.f32 %v615, %v756
        %v789 = vmul.f32 %v617, %v757
        %v790 = vmul.f32 %v619, %v758
        %v791 = vmul.f32 %v621, %v759
        %v792 = vmul.f32 %v623, %v760
        %v793 = vmul.f32 %v625, %v761
        %v794 = vmul.f32 %v627, %v762
        %v795 = vmul.f32 %v629, %v763
        %v796 = vmul.f32 %v631, %v764
        %v797 = vmul.f32 %v633, %v765
        %v798 = vmul.f32 %v635, %v766
        %v799 = vmul.f32 %v637, %v767
        %v800 = vmul.f32 %v639, %v768
        %v801 = vmul.f32 %v641, %v769
        %802 = vxpose.xlu0.b32.start [1/16] %v770, 128
        %803 = vxpose.xlu0.b32.cont [2/16] %v771, 128
        %804 = vxpose.xlu0.b32.cont [3/16] %v772, 128
        %805 = vxpose.xlu0.b32.cont [4/16] %v773, 128
        %806 = vxpose.xlu0.b32.cont [5/16] %v774, 128
        %807 = vxpose.xlu0.b32.cont [6/16] %v775, 128
        %808 = vxpose.xlu0.b32.cont [7/16] %v776, 128
        %809 = vxpose.xlu0.b32.cont [8/16] %v777, 128
        %810 = vxpose.xlu0.b32.cont [9/16] %v778, 128
        %811 = vxpose.xlu0.b32.cont [10/16] %v779, 128
        %812 = vxpose.xlu0.b32.cont [11/16] %v780, 128
        %813 = vxpose.xlu0.b32.cont [12/16] %v781, 128
        %814 = vxpose.xlu0.b32.cont [13/16] %v782, 128
        %815 = vxpose.xlu0.b32.cont [14/16] %v783, 128
        %816 = vxpose.xlu0.b32.cont [15/16] %v784, 128
        %817 = vxpose.xlu0.b32.end [16/16] %v785, 128
        %v818 = vpop.trf.xlu0
        %v819 = vpop.trf.xlu0
        %v820 = vpop.trf.xlu0
        %v821 = vpop.trf.xlu0
        %v822 = vpop.trf.xlu0
        %v823 = vpop.trf.xlu0
        %v824 = vpop.trf.xlu0
        %v825 = vpop.trf.xlu0
        %v826 = vpop.trf.xlu0
        %v827 = vpop.trf.xlu0
        %v828 = vpop.trf.xlu0
        %v829 = vpop.trf.xlu0
        %v830 = vpop.trf.xlu0
        %v831 = vpop.trf.xlu0
        %v832 = vpop.trf.xlu0
        %v833 = vpop.trf.xlu0
        %834 = vxpose.xlu0.b32.start [1/16] %v786, 128
        %835 = vxpose.xlu0.b32.cont [2/16] %v787, 128
        %836 = vxpose.xlu0.b32.cont [3/16] %v788, 128
        %837 = vxpose.xlu0.b32.cont [4/16] %v789, 128
        %838 = vxpose.xlu0.b32.cont [5/16] %v790, 128
        %839 = vxpose.xlu0.b32.cont [6/16] %v791, 128
        %840 = vxpose.xlu0.b32.cont [7/16] %v792, 128
        %841 = vxpose.xlu0.b32.cont [8/16] %v793, 128
        %842 = vxpose.xlu0.b32.cont [9/16] %v794, 128
        %843 = vxpose.xlu0.b32.cont [10/16] %v795, 128
        %844 = vxpose.xlu0.b32.cont [11/16] %v796, 128
        %845 = vxpose.xlu0.b32.cont [12/16] %v797, 128
        %846 = vxpose.xlu0.b32.cont [13/16] %v798, 128
        %847 = vxpose.xlu0.b32.cont [14/16] %v799, 128
        %848 = vxpose.xlu0.b32.cont [15/16] %v800, 128
        %849 = vxpose.xlu0.b32.end [16/16] %v801, 128
        %v850 = vpop.trf.xlu0
        %v851 = vpop.trf.xlu0
        %v852 = vpop.trf.xlu0
        %v853 = vpop.trf.xlu0
        %v854 = vpop.trf.xlu0
        %v855 = vpop.trf.xlu0
        %v856 = vpop.trf.xlu0
        %v857 = vpop.trf.xlu0
        %v858 = vpop.trf.xlu0
        %v859 = vpop.trf.xlu0
        %v860 = vpop.trf.xlu0
        %v861 = vpop.trf.xlu0
        %v862 = vpop.trf.xlu0
        %v863 = vpop.trf.xlu0
        %v864 = vpop.trf.xlu0
        %v865 = vpop.trf.xlu0
        %v866 = vmul.f32 %v818, 4.0
        %v867 = vmul.f32 %v850, 4.0
        %v868 = vsel %vm197, 1, 0
        %vm869 = vcmp.eq.s32.totalorder %v868, 1
        %v870 = vsel %vm869, %v866, -1e+30
        %v871 = vsel %vm869, %v867, -1e+30
        %872 = vmax.xlane.f32.xlu0 %v870
        %v873 = vpop.xlane.xlu0 %872
        %874 = vmax.xlane.f32.xlu0 %v871
        %v875 = vpop.xlane.xlu0 %874
        %v876 = vsub.f32 %v870, %v873
        %v877 = vsub.f32 %v871, %v875
        %v878 = vmul.f32 %v876, 1.442695
        %v879 = vpow.pop %v878
        %v880 = vmul.f32 %v877, 1.442695
        %v881 = vpow.pop %v880
        %882 = vadd.xlane.f32.xlu0 %v879
        %v883 = vpop.xlane.xlu0 %882
        %884 = vadd.xlane.f32.xlu0 %v881
        %v885 = vpop.xlane.xlu0 %884
        %v886 = vrcp.pop %v883
        %v887 = vrcp.pop %v885
        %v888 = vmul.f32 %v879, %v886
        %v889 = vmul.f32 %v881, %v887
        %v890 = vstv %s27
        %vm891 = vcmp.eq.s32.totalorder %v890, 0
        %vm892 = vcmp.eq.s32.totalorder %v890, 1
        %v893 = vsel %vm891, 1, 0
        %v894 = vsel %vm892, 1, 0
        %vm895 = vcmp.eq.s32.totalorder %v893, 1
        %vm896 = vcmp.eq.s32.totalorder %v894, 1
        %v897 = vsel %vm895, %v888, 0.0
        %v898 = vsel %vm896, %v889, 0.0
        %v899 = vadd.f32 %v897, %v898
        %v900 = vsel %vm196, 1, 0
        %vm901 = vcmp.eq.s32.totalorder %v900, 1
        %v902 = vsel %vm901, %v899, 0.0
        %903 = vst [vmem:[%s171] sm:$0xff] %v902
        %v904 = vpack.c.bf16 %v888, %v888
        %v905 = vpack.c.bf16 %v889, %v889
        %906 = vmatpush.bf16.msra.mxu0 %v301
        %907 = vmatpush.bf16.msra.mxu0 %v300
        %908 = vmatpush.bf16.msra.mxu0 %v299
        %909 = vmatpush.bf16.msra.mxu0 %v298
        %910 = vmatpush.bf16.msra.mxu0 %v297
        %911 = vmatpush.bf16.msra.mxu0 %v296
        %912 = vmatpush.bf16.msra.mxu0 %v295
        %913 = vmatpush.bf16.msra.mxu0 %v294
        %914 = vmatmul.bf16.gmra.mxu0 %v904
        %v915 = vpop.f32.mrf.mxu0
        %v916 = vadd.f32 0.0, %v915
        %v917 = vpop.f32.mrf.mxu0
        %918 = vdwg.mxu0
        %919 = vmatpush.bf16.msra.mxu0 %v309
        %920 = vmatpush.bf16.msra.mxu0 %v308
        %921 = vmatpush.bf16.msra.mxu0 %v307
        %922 = vmatpush.bf16.msra.mxu0 %v306
        %923 = vmatpush.bf16.msra.mxu0 %v305
        %924 = vmatpush.bf16.msra.mxu0 %v304
        %925 = vmatpush.bf16.msra.mxu0 %v303
        %926 = vmatpush.bf16.msra.mxu0 %v302
        %927 = vmatmul.bf16.gmra.mxu0 %v905
        %v928 = vpop.f32.mrf.mxu0
        %v929 = vadd.f32 0.0, %v928
        %v930 = vpop.f32.mrf.mxu0
        %931 = vdwg.mxu0
        %v932 = vmul.f32 %v189, %v189
        %933 = vadd.xlane.f32.xlu0 %v932
        %v934 = vpop.xlane.xlu0 %933
        %v935 = vmax.f32 %v934, 1e-16
        %v936 = vrsqrt.pop %v935
        %v937 = vmul.f32 %v936, %v935
        %v938 = vmul.f32 %v937, %v936
        %v939 = vmul.f32 0.5, %v938
        %v940 = vsub.f32 1.5, %v939
        %v941 = vmul.f32 %v936, %v940
        %vm942 = vweird.f32 %v935
        %vm943 = vweird.f32 %v936
        %vm944 = vmor %vm942, %vm943
        %v945 = vsel %vm944, %v936, %v941
        %v946 = vmul.f32 %v189, %v916
        %v947 = vmul.f32 %v189, %v929
        %948 = vadd.xlane.f32.xlu0 %v946
        %v949 = vpop.xlane.xlu0 %948
        %950 = vadd.xlane.f32.xlu0 %v947
        %v951 = vpop.xlane.xlu0 %950
        %v952 = vmul.f32 %v916, %v916
        %v953 = vmul.f32 %v929, %v929
        %954 = vadd.xlane.f32.xlu0 %v952
        %v955 = vpop.xlane.xlu0 %954
        %956 = vadd.xlane.f32.xlu0 %v953
        %v957 = vpop.xlane.xlu0 %956
        %v958 = vmul.f32 %v949, %v945
        %v959 = vmul.f32 %v951, %v945
        %v960 = vmax.f32 %v955, 1e-16
        %v961 = vmax.f32 %v957, 1e-16
        %v962 = vrsqrt.pop %v960
        %v963 = vmul.f32 %v962, %v960
        %v964 = vmul.f32 %v963, %v962
        %v965 = vmul.f32 0.5, %v964
        %v966 = vsub.f32 1.5, %v965
        %v967 = vmul.f32 %v962, %v966
        %vm968 = vweird.f32 %v960
        %vm969 = vweird.f32 %v962
        %vm970 = vmor %vm968, %vm969
        %v971 = vsel %vm970, %v962, %v967
        %v972 = vrsqrt.pop %v961
        %v973 = vmul.f32 %v972, %v961
        %v974 = vmul.f32 %v973, %v972
        %v975 = vmul.f32 0.5, %v974
        %v976 = vsub.f32 1.5, %v975
        %v977 = vmul.f32 %v972, %v976
        %vm978 = vweird.f32 %v961
        %vm979 = vweird.f32 %v972
        %vm980 = vmor %vm978, %vm979
        %v981 = vsel %vm980, %v972, %v977
        %v982 = vmul.f32 %v958, %v971
        %v983 = vmul.f32 %v959, %v981
        %v984 = vmul.f32 %v982, 5.0
        %v985 = vmul.f32 %v983, 5.0
        %v986 = vmul.f32 %v984, 1.442695
        %v987 = vpow.pop %v986
        %v988 = vmul.f32 %v985, 1.442695
        %v989 = vpow.pop %v988
        %v990 = vsel %vm901, %v987, 0.0
        %v991 = vsel %vm901, %v989, 0.0
        %v992 = vrot.slane %v990, 4
        %v993 = vadd.f32 %v990, %v992
        %v994 = vrot.slane %v993, 2
        %v995 = vadd.f32 %v993, %v994
        %v996 = vrot.slane %v995, 1
        %v997 = vadd.f32 %v995, %v996
        %v998 = vrot.slane %v991, 4
        %v999 = vadd.f32 %v991, %v998
        %v1000 = vrot.slane %v999, 2
        %v1001 = vadd.f32 %v999, %v1000
        %v1002 = vrot.slane %v1001, 1
        %v1003 = vadd.f32 %v1001, %v1002
        %v1004 = vlog2.pop %v997
        %v1005 = vmul.f32 %v1004, 0.6931472
        %v1006 = vlog2.pop %v1003
        %v1007 = vmul.f32 %v1006, 0.6931472
        %vm1010 = vcmask 1041409
        %v1011 = vsel %vm1010, %v1007, %v1005
        %vm1013 = vcmask 1024
        %1014 = vst.msk [vmem:[%s185] sm:$0x3] %vm1013, %v1011
        %s1015 = sand.u32 %s82, 1
        %s1016 = scalar_lea.sflag [#allocation5], %s1015
        %s1017 = sand.u32 %s82, 1
        %s1018 = smul.addr %s1017, 8
        %s1019 = scalar_lea.vmem [#allocation4], %s1018
        %p1020 = scmp.lt.s32.totalorder %s27, 1
        %s1021 = scalar_select %p1020, %s27, 1
        %s1022 = smul.addr %s1021, 2
        %s1023 = scalar_lea.vmem %s4, %s1022
        // Predicated region
        $region29: #{_gloria_loss_impl.2} parent=27 // pred_check
          %p1024 = pneg %p92
        $region30: #{_gloria_loss_impl.2} parent=27 // pred_check_branch
          %1026 = sbr.rel (%p1024) target = $region32
        $region31: #{_gloria_loss_impl.2} parent=27 // pred_region
          %1028 = vsyncadd %s1016, 0
          %s1029 = smul.addr %s27, 8
          %s1030 = scalar_lea.hbm %s3, %s1029
          %s1032 = sshll.u32 %s1019, 4
          %s1033 = int_to_ptr.vmem [resolvable:$true] %s1032
          %s1034 = sshll.u32 %s1030, 4
          %s1035 = int_to_ptr.hbm [resolvable:$true] %s1034
          %1037 = dma.vmem_to_hbm [thread:$0]  %s1033, 128, %s1035, %s1016
        $region32: #{_gloria_loss_impl.2} parent=27 // pred_fallthru
          _
        // Predicated region
        $region33: #{_gloria_loss_impl.2} parent=27 // pred_check
          %p1038 = pneg %p118
        $region34: #{_gloria_loss_impl.2} parent=27 // pred_check_branch
          %1040 = sbr.rel (%p1038) target = $region36
        $region35: #{_gloria_loss_impl.2} parent=27 // pred_region
          _
        $region36: #{_gloria_loss_impl.2} parent=27 // pred_fallthru
          _
      $region28: #{_gloria_loss_impl.2} parent=5 // pred_fallthru
        _
      %p1041 = scmp.le.s32.totalorder 2, %s22
      // Predicated region
      $region37: #{_gloria_loss_impl.2} parent=5 // pred_check
        %p1042 = pneg %p1041
      $region38: #{_gloria_loss_impl.2} parent=5 // pred_check_branch
        %1044 = sbr.rel (%p1042) target = $region40
      $region39: #{_gloria_loss_impl.2} parent=5 // pred_region
        %s1045 = ssub.s32 %s22, 2
        // Predicated region
        $region41: #{_gloria_loss_impl.2} parent=39 // pred_check
          %p1046 = pneg %p98
        $region42: #{_gloria_loss_impl.2} parent=39 // pred_check_branch
          %1048 = sbr.rel (%p1046) target = $region44
        $region43: #{_gloria_loss_impl.2} parent=39 // pred_region
          %s1049 = sand.u32 %s83, 1
          %s1050 = scalar_lea.sflag [#allocation5], %s1049
          %s1051 = sand.u32 %s83, 1
          %s1052 = smul.addr %s1051, 8
          %s1053 = scalar_lea.vmem [#allocation4], %s1052
          %1055 = dma.done %s1050, 128
        $region44: #{_gloria_loss_impl.2} parent=39 // pred_fallthru
          _
        // Predicated region
        $region45: #{_gloria_loss_impl.2} parent=39 // pred_check
          %p1056 = pneg %p124
        $region46: #{_gloria_loss_impl.2} parent=39 // pred_check_branch
          %1058 = sbr.rel (%p1056) target = $region48
        $region47: #{_gloria_loss_impl.2} parent=39 // pred_region
          %p1059 = scmp.lt.s32.totalorder %s28, 1
          %s1060 = scalar_select %p1059, %s28, 1
          %s1061 = smul.addr %s1060, 2
          %s1062 = scalar_lea.vmem %s4, %s1061
        $region48: #{_gloria_loss_impl.2} parent=39 // pred_fallthru
          _
      $region40: #{_gloria_loss_impl.2} parent=5 // pred_fallthru
        _
    $region6: #{_gloria_loss_impl.2} parent=1 // loop_footer
      %s26 = sadd.s32 1, %s22
    $region7: #{_gloria_loss_impl.2} parent=1 // loop_footer_branch
      %21 = sbr.rel target = $region3
    $region8: #{_gloria_loss_impl.2} parent=1 // loop_exit
      _
    %1063 = vsyncpa [#allocation5], 1
    %s1064 = scalar_lea.sflag [#allocation5], 1
    %1065 = vsyncpa %s1064, 1

</llo_original>
